<compile_context>
chip_gen: v7x
topology: tpu7x:2x2x1
jax: 0.10.0
libtpu: 0.0.40
codegen_flags: <defaults>
</compile_context>

<pallas_src>
import functools

import jax
import jax.numpy as jnp
from jax import lax
from jax.experimental import pallas as pl
from jax.experimental.pallas import tpu as pltpu


# ---------------------------------------------------------------------------
# fused kernel: all blocks in one invocation, residual kept resident
# ---------------------------------------------------------------------------
def _fused_tasnet_kernel(x_ref, w1_ref, bd_ref, w2p_ref, bc_ref, out_ref, h_ref,
                         *, time, per, dilations):
    d_ch = w1_ref.shape[1]
    n = per * time

    # Merge the `per` batch elements of this grid step into the lane axis (on-chip VMEM
    # concat -- replaces the old wrapper reshape/transpose HBM passes).
    if per == 1:
        resid = x_ref[0]                                               # (C, T) f32
    else:
        resid = jnp.concatenate([x_ref[p] for p in range(per)], axis=1)  # (C, per*T) f32

    # Hoisted once: local time index within each merged batch segment, shape (1, N).
    lt = lax.broadcasted_iota(jnp.int32, (1, time), 1)
    local_t = lt if per == 1 else jnp.tile(lt, (1, per))

    for i, dil in enumerate(dilations):            # static unroll: dil is compile-time
        # 1x1 conv C->D with BN1/BN2 pre-folded: bf16 MXU operands, f32 accumulation.
        u = jnp.dot(w1_ref[i], resid.astype(jnp.bfloat16),
                    preferred_element_type=jnp.float32) + bd_ref[i]    # (D, N) f32

        if dil < time:
            # Depthwise dilated taps via XLU lane rolls + (1, N) float masks.  The masks
            # also zero taps that would leak across merged batch segments.
            ml = jnp.where(local_t >= dil, 1.0, 0.0)                   # (1, N) f32
            mr = jnp.where(local_t < time - dil, 1.0, 0.0)             # (1, N) f32
            left = pltpu.roll(u, dil, axis=1) * ml
            right = pltpu.roll(u, n - dil, axis=1) * mr

            # K = 3D operand for the folded second 1x1 conv, staged through a reused
            # bf16 VMEM scratch (bounds live ranges across the unrolled block loop).
            h_ref[0:d_ch, :] = left.astype(jnp.bfloat16)
            h_ref[d_ch:2 * d_ch, :] = u.astype(jnp.bfloat16)
            h_ref[2 * d_ch:3 * d_ch, :] = right.astype(jnp.bfloat16)
            delta = jnp.dot(w2p_ref[i], h_ref[...],
                            preferred_element_type=jnp.float32)        # (C, N) f32
        else:
            # Side taps fall entirely into the zero padding -> only the center tap.
            delta = jnp.dot(w2p_ref[i][:, d_ch:2 * d_ch], u.astype(jnp.bfloat16),
                            preferred_element_type=jnp.float32)

        resid = resid + delta + bc_ref[i]          # residual add, f32

    for p in range(per):
        out_ref[p] = resid[:, p * time:(p + 1) * time].astype(out_ref.dtype)


# ---------------------------------------------------------------------------
# grid / VMEM sizing helpers
# ---------------------------------------------------------------------------
def _device_kind():
    try:
        return jax.devices()[0].device_kind.lower()
    except Exception:
        return ""


def _default_groups(batch, time, min_lanes=512):
    """Grid steps over the batch. Prefer >= min_lanes merged lanes per step (MXU fill and
    DMA/compute overlap); never fewer steps than TensorCores on multi-TC chips."""
    kind = _device_kind()
    cores = 2 if any(s in kind for s in ("v4", "v5p", "v7")) else 1
    divisors = [g for g in range(1, batch + 1) if batch % g == 0]
    big = [g for g in divisors if (batch // g) * time >= min_lanes]
    groups = max(big) if big else 1
    if groups < cores and batch % cores == 0:
        groups = cores
    return groups


def _vmem_budget(c_ch, d_ch, per, time, nblocks):
    n = per * time
    f32, bf16 = 4, 2
    acts = 2 * 2 * per * c_ch * time * f32                         # in + out blocks, double-buffered
    wts = 2 * nblocks * (d_ch * c_ch + c_ch * 3 * d_ch) * bf16     # W1 + W2'
    wts += 2 * nblocks * (d_ch + c_ch) * 128 * f32                 # biases (last dim pads to 128)
    scratch = 3 * d_ch * n * bf16                                  # H scratch
    live = (2 * c_ch + 4 * d_ch) * n * f32                         # resid/delta + u/left/right
    est = acts + wts + scratch + live
    cap = (56 << 20) if "v7" in _device_kind() else (100 << 20)    # v7x: 64 MiB physical
    return int(min(max(2 * est, 32 << 20), cap))


def build_forward(nblocks, batch, c_ch, d_ch, time, *, groups=None, min_lanes=512):
    if groups is None:
        groups = _default_groups(batch, time, min_lanes)
    assert batch % groups == 0, "groups must divide batch"
    per = batch // groups
    n_lanes = per * time
    dilations = tuple(2 ** i for i in range(nblocks))
    kernel = functools.partial(_fused_tasnet_kernel, time=time, per=per, dilations=dilations)

    call = pl.pallas_call(
        kernel,
        out_shape=jax.ShapeDtypeStruct((batch, c_ch, time), jnp.float32),
        grid_spec=pltpu.PrefetchScalarGridSpec(
            num_scalar_prefetch=0,
            grid=(groups,),
            in_specs=[
                pl.BlockSpec((per, c_ch, time), lambda g: (g, 0, 0)),      # residual block
                pl.BlockSpec((nblocks, d_ch, c_ch), lambda g: (0, 0, 0)),  # W1 (BN-folded, bf16)
                pl.BlockSpec((nblocks, d_ch, 1), lambda g: (0, 0, 0)),     # bias_d (f32)
                pl.BlockSpec((nblocks, c_ch, 3 * d_ch), lambda g: (0, 0, 0)),  # W2' taps-folded (bf16)
                pl.BlockSpec((nblocks, c_ch, 1), lambda g: (0, 0, 0)),     # bias_c (f32)
            ],
            out_specs=pl.BlockSpec((per, c_ch, time), lambda g: (g, 0, 0)),
            scratch_shapes=[pltpu.VMEM((3 * d_ch, n_lanes), jnp.bfloat16)],
        ),
        input_output_aliases={0: 0},                    # in-place residual update
        compiler_params=pltpu.CompilerParams(
            dimension_semantics=("parallel",),
            vmem_limit_bytes=_vmem_budget(c_ch, d_ch, per, time, nblocks)),
    )

    def fwd(x, w1f, bias_d, w2p, bias_c):
        return call(x, w1f, bias_d, w2p, bias_c)

    # Donate x so the {0: 0} alias is a true in-place update (no defensive HBM copy).
    return jax.jit(fwd, donate_argnums=(0,))


# ---------------------------------------------------------------------------
# deterministic synthetic parameters (no checkpoint) + BN / depthwise folding
# ---------------------------------------------------------------------------
def make_raw_params(key, c_ch, d_ch, blocks):
    params = []
    for i in range(blocks):
        ks = jax.random.split(jax.random.fold_in(key, i), 15)

        def bn(kg, kb, km, kv, ch):
            gamma = 1.0 + 0.1 * jax.random.normal(kg, (ch,), jnp.float32)
            beta = 0.1 * jax.random.normal(kb, (ch,), jnp.float32)
            mean = 0.1 * jax.random.normal(km, (ch,), jnp.float32)
            var = 0.5 + jax.random.uniform(kv, (ch,), jnp.float32)
            return gamma, beta, mean, var

        g1, be1, m1, v1 = bn(ks[0], ks[1], ks[2], ks[3], c_ch)
        w1 = 0.1 * jax.random.normal(ks[4], (d_ch, c_ch), jnp.float32)
        g2, be2, m2, v2 = bn(ks[5], ks[6], ks[7], ks[8], d_ch)
        wd = 0.1 * jax.random.normal(ks[9], (d_ch, 3), jnp.float32)
        g3, be3, m3, v3 = bn(ks[10], ks[11], ks[12], ks[13], d_ch)
        w2 = 0.1 * jax.random.normal(ks[14], (c_ch, d_ch), jnp.float32)
        params.append((g1, be1, m1, v1, w1, g2, be2, m2, v2, wd, g3, be3, m3, v3, w2))
    return params


def fold_params(raw_params, eps=1e-5):
    """Fold eval-mode BatchNorms into the 1x1 convs, and the 3 depthwise taps into the
    second 1x1 conv (W2' has shape (C, 3D), ordered [left | center | right])."""
    w1_l, bd_l, w2p_l, bc_l = [], [], [], []
    for (g1, be1, m1, v1, w1, g2, be2, m2, v2, wd, g3, be3, m3, v3, w2) in raw_params:
        s1 = g1 / jnp.sqrt(v1 + eps); t1 = be1 - m1 * s1
        s2 = g2 / jnp.sqrt(v2 + eps); t2 = be2 - m2 * s2
        s3 = g3 / jnp.sqrt(v3 + eps); t3 = be3 - m3 * s3
        w1f = w1 * s1[None, :] * s2[:, None]            # BN1 (cols) & BN2 (rows) into W1
        bd = s2 * (w1 @ t1) + t2                        # (D,)
        w2f = w2 * s3[None, :]                          # BN3 (cols) into W2
        bc = w2 @ t3                                    # (C,)
        w2p = jnp.concatenate([w2f * wd[:, 0][None, :],
                               w2f * wd[:, 1][None, :],
                               w2f * wd[:, 2][None, :]], axis=1)   # (C, 3D)
        w1_l.append(w1f); bd_l.append(bd[:, None]); w2p_l.append(w2p); bc_l.append(bc[:, None])
    return (jnp.stack(w1_l).astype(jnp.bfloat16),       # MXU operands stored bf16
            jnp.stack(bd_l),                            # biases stay f32
            jnp.stack(w2p_l).astype(jnp.bfloat16),
            jnp.stack(bc_l))


# ---------------------------------------------------------------------------
# pure-JAX reference (lax convs, unfolded BN) for correctness check
# ---------------------------------------------------------------------------
def reference_forward(x, raw_params, eps=1e-5):
    resid = x
    dn = ("NCH", "OIH", "NCH")
    prec = lax.Precision.HIGHEST
    for i, (g1, be1, m1, v1, w1, g2, be2, m2, v2, wd, g3, be3, m3, v3, w2) in enumerate(raw_params):
        dil = 2 ** i
        d_ch = w1.shape[0]
        s1 = g1 / jnp.sqrt(v1 + eps); t1 = be1 - m1 * s1
        s2 = g2 / jnp.sqrt(v2 + eps); t2 = be2 - m2 * s2
        s3 = g3 / jnp.sqrt(v3 + eps); t3 = be3 - m3 * s3
        h = resid * s1[None, :, None] + t1[None, :, None]
        h = lax.conv_general_dilated(h, w1[:, :, None], (1,), "VALID",
                                     dimension_numbers=dn, precision=prec)
        h = h * s2[None, :, None] + t2[None, :, None]
        h = lax.conv_general_dilated(h, wd[:, None, :], (1,), [(dil, dil)],
                                     rhs_dilation=(dil,), dimension_numbers=dn,
                                     feature_group_count=d_ch, precision=prec)
        h = h * s3[None, :, None] + t3[None, :, None]
        h = lax.conv_general_dilated(h, w2[:, :, None], (1,), "VALID",
                                     dimension_numbers=dn, precision=prec)
        resid = resid + h
    return resid


if __name__ == "__main__":
    batch = 2
    bottleneck_channels = 16
    dconv_size = 32
    time = 128
    blocks = 8          # dilations 1, 2, 4, ..., 128

    key = jax.random.PRNGKey(0)
    kx, kp = jax.random.split(key)
    x = jax.random.normal(kx, (batch, bottleneck_channels, time), jnp.float32)
    raw_params = make_raw_params(kp, bottleneck_channels, dconv_size, blocks)
    folded = fold_params(raw_params)

    ref = jax.block_until_ready(reference_forward(x, raw_params))

    forward = build_forward(blocks, batch, bottleneck_channels, dconv_size, time)
    out = jax.block_until_ready(forward(x, *folded))

    assert out.shape == ref.shape == (batch, bottleneck_channels, time)
    max_err = float(jnp.max(jnp.abs(out - ref)))
    # bf16 MXU operands (documented TPU behavior) across 8 chained residual blocks ->
    # ~1e-3-level deviation vs the HIGHEST-precision lax-conv reference.
    assert jnp.allclose(out, ref, rtol=2e-3, atol=2e-3), max_err

    print("KERNEL_OK")
</pallas_src>

<mosaic_0001>
module attributes {stable_mosaic.version = 11 : i64} {
  func.func @_fused_tasnet_kernel(%arg0: i32, %arg1: memref<2x16x128xf32, #tpu.memory_space<vmem>>, %arg2: memref<8x32x16xbf16, #tpu.memory_space<vmem>>, %arg3: memref<8x32x1xf32, #tpu.memory_space<vmem>>, %arg4: memref<8x16x96xbf16, #tpu.memory_space<vmem>>, %arg5: memref<8x16x1xf32, #tpu.memory_space<vmem>>, %arg6: memref<2x16x128xf32, #tpu.memory_space<vmem>>, %arg7: memref<96x256xbf16, #tpu.memory_space<vmem>>) attributes {dimension_semantics = [#tpu.dimension_semantics<parallel>], iteration_bounds = array<i64: 1>, scalar_prefetch = 0 : i64, scratch_operands = 1 : i64, tpu.core_type = #tpu.core_type<tc>, window_params = [{transform_indices = @transform_0, window_bounds = array<i64: 2, 16, 128>}, {pipeline_mode = #tpu.pipeline_mode<synchronous>, transform_indices = @transform_1, window_bounds = array<i64: 8, 32, 16>}, {pipeline_mode = #tpu.pipeline_mode<synchronous>, transform_indices = @transform_2, window_bounds = array<i64: 8, 32, 1>}, {pipeline_mode = #tpu.pipeline_mode<synchronous>, transform_indices = @transform_3, window_bounds = array<i64: 8, 16, 96>}, {pipeline_mode = #tpu.pipeline_mode<synchronous>, transform_indices = @transform_4, window_bounds = array<i64: 8, 16, 1>}, {transform_indices = @transform_5, window_bounds = array<i64: 2, 16, 128>}]} {
    %c0 = arith.constant 0 : index
    %c0_0 = arith.constant 0 : index
    %c0_1 = arith.constant 0 : index
    %0 = vector.load %arg1[%c0, %c0_0, %c0_1] : memref<2x16x128xf32, #tpu.memory_space<vmem>>, vector<1x16x128xf32>
    %1 = vector.shape_cast %0 : vector<1x16x128xf32> to vector<16x128xf32>
    %c1 = arith.constant 1 : index
    %c0_2 = arith.constant 0 : index
    %c0_3 = arith.constant 0 : index
    %2 = vector.load %arg1[%c1, %c0_2, %c0_3] : memref<2x16x128xf32, #tpu.memory_space<vmem>>, vector<1x16x128xf32>
    %3 = vector.shape_cast %2 : vector<1x16x128xf32> to vector<16x128xf32>
    %4 = tpu.concatenate %1, %3 in 1 : vector<16x128xf32>, vector<16x128xf32> -> vector<16x256xf32>
    %5 = tpu.iota {dimensions = array<i32: 1>} : vector<1x128xi32>
    %6 = tpu.concatenate %5, %5 in 1 : vector<1x128xi32>, vector<1x128xi32> -> vector<1x256xi32>
    %c0_4 = arith.constant 0 : index
    %c0_5 = arith.constant 0 : index
    %c0_6 = arith.constant 0 : index
    %7 = vector.load %arg2[%c0_4, %c0_5, %c0_6] : memref<8x32x16xbf16, #tpu.memory_space<vmem>>, vector<1x32x16xbf16>
    %8 = vector.shape_cast %7 : vector<1x32x16xbf16> to vector<32x16xbf16>
    %9 = arith.truncf %4 : vector<16x256xf32> to vector<16x256xbf16>
    %cst = arith.constant dense<0.000000e+00> : vector<32x256xf32>
    %10 = tpu.matmul %8, %9, %cst {dimension_numbers = #tpu.dot_dimension_numbers<[1], [0], [0], [1], [0, 0, 1, 1], [], []>} : vector<32x16xbf16>, vector<16x256xbf16>, vector<32x256xf32> -> vector<32x256xf32>
    %c0_7 = arith.constant 0 : index
    %c0_8 = arith.constant 0 : index
    %c0_9 = arith.constant 0 : index
    %11 = vector.load %arg3[%c0_7, %c0_8, %c0_9] : memref<8x32x1xf32, #tpu.memory_space<vmem>>, vector<1x32x1xf32>
    %12 = vector.shape_cast %11 : vector<1x32x1xf32> to vector<32x1xf32>
    %13 = vector.broadcast %12 : vector<32x1xf32> to vector<32x256xf32>
    %14 = arith.addf %10, %13 : vector<32x256xf32>
    %c1_i32 = arith.constant 1 : i32
    %15 = vector.broadcast %c1_i32 : i32 to vector<1x256xi32>
    %16 = arith.cmpi sge, %6, %15 : vector<1x256xi32>
    %cst_10 = arith.constant 1.000000e+00 : f32
    %cst_11 = arith.constant 0.000000e+00 : f32
    %17 = vector.broadcast %cst_10 : f32 to vector<1x256xf32>
    %18 = vector.broadcast %cst_11 : f32 to vector<1x256xf32>
    %19 = arith.select %16, %17, %18 : vector<1x256xi1>, vector<1x256xf32>
    %c127_i32 = arith.constant 127 : i32
    %20 = vector.broadcast %c127_i32 : i32 to vector<1x256xi32>
    %21 = arith.cmpi slt, %6, %20 : vector<1x256xi32>
    %cst_12 = arith.constant 1.000000e+00 : f32
    %cst_13 = arith.constant 0.000000e+00 : f32
    %22 = vector.broadcast %cst_12 : f32 to vector<1x256xf32>
    %23 = vector.broadcast %cst_13 : f32 to vector<1x256xf32>
    %24 = arith.select %21, %22, %23 : vector<1x256xi1>, vector<1x256xf32>
    %c1_i32_14 = arith.constant 1 : i32
    %25 = tpu.dynamic_rotate %14 by %c1_i32_14 dim 1 : vector<32x256xf32>, i32 -> vector<32x256xf32>
    %26 = vector.broadcast %19 : vector<1x256xf32> to vector<32x256xf32>
    %27 = arith.mulf %25, %26 : vector<32x256xf32>
    %c255_i32 = arith.constant 255 : i32
    %28 = tpu.dynamic_rotate %14 by %c255_i32 dim 1 : vector<32x256xf32>, i32 -> vector<32x256xf32>
    %29 = vector.broadcast %24 : vector<1x256xf32> to vector<32x256xf32>
    %30 = arith.mulf %28, %29 : vector<32x256xf32>
    %31 = arith.truncf %27 : vector<32x256xf32> to vector<32x256xbf16>
    %c0_15 = arith.constant 0 : index
    %c0_16 = arith.constant 0 : index
    %32 = vector.load %arg7[%c0_15, %c0_16] : memref<96x256xbf16, #tpu.memory_space<vmem>>, vector<32x256xbf16>
    tpu.vector_store %arg7[%c0_15, %c0_16], %31 {strides = array<i32>} : memref<96x256xbf16, #tpu.memory_space<vmem>>, vector<32x256xbf16>,
    %33 = arith.truncf %14 : vector<32x256xf32> to vector<32x256xbf16>
    %c32 = arith.constant 32 : index
    %c0_17 = arith.constant 0 : index
    %34 = vector.load %arg7[%c32, %c0_17] : memref<96x256xbf16, #tpu.memory_space<vmem>>, vector<32x256xbf16>
    tpu.vector_store %arg7[%c32, %c0_17], %33 {strides = array<i32>} : memref<96x256xbf16, #tpu.memory_space<vmem>>, vector<32x256xbf16>,
    %35 = arith.truncf %30 : vector<32x256xf32> to vector<32x256xbf16>
    %c64 = arith.constant 64 : index
    %c0_18 = arith.constant 0 : index
    %36 = vector.load %arg7[%c64, %c0_18] : memref<96x256xbf16, #tpu.memory_space<vmem>>, vector<32x256xbf16>
    tpu.vector_store %arg7[%c64, %c0_18], %35 {strides = array<i32>} : memref<96x256xbf16, #tpu.memory_space<vmem>>, vector<32x256xbf16>,
    %c0_19 = arith.constant 0 : index
    %c0_20 = arith.constant 0 : index
    %c0_21 = arith.constant 0 : index
    %37 = vector.load %arg4[%c0_19, %c0_20, %c0_21] : memref<8x16x96xbf16, #tpu.memory_space<vmem>>, vector<1x16x96xbf16>
    %38 = vector.shape_cast %37 : vector<1x16x96xbf16> to vector<16x96xbf16>
    %c0_22 = arith.constant 0 : index
    %c0_23 = arith.constant 0 : index
    %39 = vector.load %arg7[%c0_22, %c0_23] : memref<96x256xbf16, #tpu.memory_space<vmem>>, vector<96x256xbf16>
    %cst_24 = arith.constant dense<0.000000e+00> : vector<16x256xf32>
    %40 = tpu.matmul %38, %39, %cst_24 {dimension_numbers = #tpu.dot_dimension_numbers<[1], [0], [0], [1], [0, 0, 1, 1], [], []>} : vector<16x96xbf16>, vector<96x256xbf16>, vector<16x256xf32> -> vector<16x256xf32>
    %41 = arith.addf %4, %40 : vector<16x256xf32>
    %c0_25 = arith.constant 0 : index
    %c0_26 = arith.constant 0 : index
    %c0_27 = arith.constant 0 : index
    %42 = vector.load %arg5[%c0_25, %c0_26, %c0_27] : memref<8x16x1xf32, #tpu.memory_space<vmem>>, vector<1x16x1xf32>
    %43 = vector.shape_cast %42 : vector<1x16x1xf32> to vector<16x1xf32>
    %44 = vector.broadcast %43 : vector<16x1xf32> to vector<16x256xf32>
    %45 = arith.addf %41, %44 : vector<16x256xf32>
    %c1_28 = arith.constant 1 : index
    %c0_29 = arith.constant 0 : index
    %c0_30 = arith.constant 0 : index
    %46 = vector.load %arg2[%c1_28, %c0_29, %c0_30] : memref<8x32x16xbf16, #tpu.memory_space<vmem>>, vector<1x32x16xbf16>
    %47 = vector.shape_cast %46 : vector<1x32x16xbf16> to vector<32x16xbf16>
    %48 = arith.truncf %45 : vector<16x256xf32> to vector<16x256xbf16>
    %cst_31 = arith.constant dense<0.000000e+00> : vector<32x256xf32>
    %49 = tpu.matmul %47, %48, %cst_31 {dimension_numbers = #tpu.dot_dimension_numbers<[1], [0], [0], [1], [0, 0, 1, 1], [], []>} : vector<32x16xbf16>, vector<16x256xbf16>, vector<32x256xf32> -> vector<32x256xf32>
    %c1_32 = arith.constant 1 : index
    %c0_33 = arith.constant 0 : index
    %c0_34 = arith.constant 0 : index
    %50 = vector.load %arg3[%c1_32, %c0_33, %c0_34] : memref<8x32x1xf32, #tpu.memory_space<vmem>>, vector<1x32x1xf32>
    %51 = vector.shape_cast %50 : vector<1x32x1xf32> to vector<32x1xf32>
    %52 = vector.broadcast %51 : vector<32x1xf32> to vector<32x256xf32>
    %53 = arith.addf %49, %52 : vector<32x256xf32>
    %c2_i32 = arith.constant 2 : i32
    %54 = vector.broadcast %c2_i32 : i32 to vector<1x256xi32>
    %55 = arith.cmpi sge, %6, %54 : vector<1x256xi32>
    %cst_35 = arith.constant 1.000000e+00 : f32
    %cst_36 = arith.constant 0.000000e+00 : f32
    %56 = vector.broadcast %cst_35 : f32 to vector<1x256xf32>
    %57 = vector.broadcast %cst_36 : f32 to vector<1x256xf32>
    %58 = arith.select %55, %56, %57 : vector<1x256xi1>, vector<1x256xf32>
    %c126_i32 = arith.constant 126 : i32
    %59 = vector.broadcast %c126_i32 : i32 to vector<1x256xi32>
    %60 = arith.cmpi slt, %6, %59 : vector<1x256xi32>
    %cst_37 = arith.constant 1.000000e+00 : f32
    %cst_38 = arith.constant 0.000000e+00 : f32
    %61 = vector.broadcast %cst_37 : f32 to vector<1x256xf32>
    %62 = vector.broadcast %cst_38 : f32 to vector<1x256xf32>
    %63 = arith.select %60, %61, %62 : vector<1x256xi1>, vector<1x256xf32>
    %c2_i32_39 = arith.constant 2 : i32
    %64 = tpu.dynamic_rotate %53 by %c2_i32_39 dim 1 : vector<32x256xf32>, i32 -> vector<32x256xf32>
    %65 = vector.broadcast %58 : vector<1x256xf32> to vector<32x256xf32>
    %66 = arith.mulf %64, %65 : vector<32x256xf32>
    %c254_i32 = arith.constant 254 : i32
    %67 = tpu.dynamic_rotate %53 by %c254_i32 dim 1 : vector<32x256xf32>, i32 -> vector<32x256xf32>
    %68 = vector.broadcast %63 : vector<1x256xf32> to vector<32x256xf32>
    %69 = arith.mulf %67, %68 : vector<32x256xf32>
    %70 = arith.truncf %66 : vector<32x256xf32> to vector<32x256xbf16>
    %c0_40 = arith.constant 0 : index
    %c0_41 = arith.constant 0 : index
    %71 = vector.load %arg7[%c0_40, %c0_41] : memref<96x256xbf16, #tpu.memory_space<vmem>>, vector<32x256xbf16>
    tpu.vector_store %arg7[%c0_40, %c0_41], %70 {strides = array<i32>} : memref<96x256xbf16, #tpu.memory_space<vmem>>, vector<32x256xbf16>,
    %72 = arith.truncf %53 : vector<32x256xf32> to vector<32x256xbf16>
    %c32_42 = arith.constant 32 : index
    %c0_43 = arith.constant 0 : index
    %73 = vector.load %arg7[%c32_42, %c0_43] : memref<96x256xbf16, #tpu.memory_space<vmem>>, vector<32x256xbf16>
    tpu.vector_store %arg7[%c32_42, %c0_43], %72 {strides = array<i32>} : memref<96x256xbf16, #tpu.memory_space<vmem>>, vector<32x256xbf16>,
    %74 = arith.truncf %69 : vector<32x256xf32> to vector<32x256xbf16>
    %c64_44 = arith.constant 64 : index
    %c0_45 = arith.constant 0 : index
    %75 = vector.load %arg7[%c64_44, %c0_45] : memref<96x256xbf16, #tpu.memory_space<vmem>>, vector<32x256xbf16>
    tpu.vector_store %arg7[%c64_44, %c0_45], %74 {strides = array<i32>} : memref<96x256xbf16, #tpu.memory_space<vmem>>, vector<32x256xbf16>,
    %c1_46 = arith.constant 1 : index
    %c0_47 = arith.constant 0 : index
    %c0_48 = arith.constant 0 : index
    %76 = vector.load %arg4[%c1_46, %c0_47, %c0_48] : memref<8x16x96xbf16, #tpu.memory_space<vmem>>, vector<1x16x96xbf16>
    %77 = vector.shape_cast %76 : vector<1x16x96xbf16> to vector<16x96xbf16>
    %c0_49 = arith.constant 0 : index
    %c0_50 = arith.constant 0 : index
    %78 = vector.load %arg7[%c0_49, %c0_50] : memref<96x256xbf16, #tpu.memory_space<vmem>>, vector<96x256xbf16>
    %cst_51 = arith.constant dense<0.000000e+00> : vector<16x256xf32>
    %79 = tpu.matmul %77, %78, %cst_51 {dimension_numbers = #tpu.dot_dimension_numbers<[1], [0], [0], [1], [0, 0, 1, 1], [], []>} : vector<16x96xbf16>, vector<96x256xbf16>, vector<16x256xf32> -> vector<16x256xf32>
    %80 = arith.addf %45, %79 : vector<16x256xf32>
    %c1_52 = arith.constant 1 : index
    %c0_53 = arith.constant 0 : index
    %c0_54 = arith.constant 0 : index
    %81 = vector.load %arg5[%c1_52, %c0_53, %c0_54] : memref<8x16x1xf32, #tpu.memory_space<vmem>>, vector<1x16x1xf32>
    %82 = vector.shape_cast %81 : vector<1x16x1xf32> to vector<16x1xf32>
    %83 = vector.broadcast %82 : vector<16x1xf32> to vector<16x256xf32>
    %84 = arith.addf %80, %83 : vector<16x256xf32>
    %c2 = arith.constant 2 : index
    %c0_55 = arith.constant 0 : index
    %c0_56 = arith.constant 0 : index
    %85 = vector.load %arg2[%c2, %c0_55, %c0_56] : memref<8x32x16xbf16, #tpu.memory_space<vmem>>, vector<1x32x16xbf16>
    %86 = vector.shape_cast %85 : vector<1x32x16xbf16> to vector<32x16xbf16>
    %87 = arith.truncf %84 : vector<16x256xf32> to vector<16x256xbf16>
    %cst_57 = arith.constant dense<0.000000e+00> : vector<32x256xf32>
    %88 = tpu.matmul %86, %87, %cst_57 {dimension_numbers = #tpu.dot_dimension_numbers<[1], [0], [0], [1], [0, 0, 1, 1], [], []>} : vector<32x16xbf16>, vector<16x256xbf16>, vector<32x256xf32> -> vector<32x256xf32>
    %c2_58 = arith.constant 2 : index
    %c0_59 = arith.constant 0 : index
    %c0_60 = arith.constant 0 : index
    %89 = vector.load %arg3[%c2_58, %c0_59, %c0_60] : memref<8x32x1xf32, #tpu.memory_space<vmem>>, vector<1x32x1xf32>
    %90 = vector.shape_cast %89 : vector<1x32x1xf32> to vector<32x1xf32>
    %91 = vector.broadcast %90 : vector<32x1xf32> to vector<32x256xf32>
    %92 = arith.addf %88, %91 : vector<32x256xf32>
    %c4_i32 = arith.constant 4 : i32
    %93 = vector.broadcast %c4_i32 : i32 to vector<1x256xi32>
    %94 = arith.cmpi sge, %6, %93 : vector<1x256xi32>
    %cst_61 = arith.constant 1.000000e+00 : f32
    %cst_62 = arith.constant 0.000000e+00 : f32
    %95 = vector.broadcast %cst_61 : f32 to vector<1x256xf32>
    %96 = vector.broadcast %cst_62 : f32 to vector<1x256xf32>
    %97 = arith.select %94, %95, %96 : vector<1x256xi1>, vector<1x256xf32>
    %c124_i32 = arith.constant 124 : i32
    %98 = vector.broadcast %c124_i32 : i32 to vector<1x256xi32>
    %99 = arith.cmpi slt, %6, %98 : vector<1x256xi32>
    %cst_63 = arith.constant 1.000000e+00 : f32
    %cst_64 = arith.constant 0.000000e+00 : f32
    %100 = vector.broadcast %cst_63 : f32 to vector<1x256xf32>
    %101 = vector.broadcast %cst_64 : f32 to vector<1x256xf32>
    %102 = arith.select %99, %100, %101 : vector<1x256xi1>, vector<1x256xf32>
    %c4_i32_65 = arith.constant 4 : i32
    %103 = tpu.dynamic_rotate %92 by %c4_i32_65 dim 1 : vector<32x256xf32>, i32 -> vector<32x256xf32>
    %104 = vector.broadcast %97 : vector<1x256xf32> to vector<32x256xf32>
    %105 = arith.mulf %103, %104 : vector<32x256xf32>
    %c252_i32 = arith.constant 252 : i32
    %106 = tpu.dynamic_rotate %92 by %c252_i32 dim 1 : vector<32x256xf32>, i32 -> vector<32x256xf32>
    %107 = vector.broadcast %102 : vector<1x256xf32> to vector<32x256xf32>
    %108 = arith.mulf %106, %107 : vector<32x256xf32>
    %109 = arith.truncf %105 : vector<32x256xf32> to vector<32x256xbf16>
    %c0_66 = arith.constant 0 : index
    %c0_67 = arith.constant 0 : index
    %110 = vector.load %arg7[%c0_66, %c0_67] : memref<96x256xbf16, #tpu.memory_space<vmem>>, vector<32x256xbf16>
    tpu.vector_store %arg7[%c0_66, %c0_67], %109 {strides = array<i32>} : memref<96x256xbf16, #tpu.memory_space<vmem>>, vector<32x256xbf16>,
    %111 = arith.truncf %92 : vector<32x256xf32> to vector<32x256xbf16>
    %c32_68 = arith.constant 32 : index
    %c0_69 = arith.constant 0 : index
    %112 = vector.load %arg7[%c32_68, %c0_69] : memref<96x256xbf16, #tpu.memory_space<vmem>>, vector<32x256xbf16>
    tpu.vector_store %arg7[%c32_68, %c0_69], %111 {strides = array<i32>} : memref<96x256xbf16, #tpu.memory_space<vmem>>, vector<32x256xbf16>,
    %113 = arith.truncf %108 : vector<32x256xf32> to vector<32x256xbf16>
    %c64_70 = arith.constant 64 : index
    %c0_71 = arith.constant 0 : index
    %114 = vector.load %arg7[%c64_70, %c0_71] : memref<96x256xbf16, #tpu.memory_space<vmem>>, vector<32x256xbf16>
    tpu.vector_store %arg7[%c64_70, %c0_71], %113 {strides = array<i32>} : memref<96x256xbf16, #tpu.memory_space<vmem>>, vector<32x256xbf16>,
    %c2_72 = arith.constant 2 : index
    %c0_73 = arith.constant 0 : index
    %c0_74 = arith.constant 0 : index
    %115 = vector.load %arg4[%c2_72, %c0_73, %c0_74] : memref<8x16x96xbf16, #tpu.memory_space<vmem>>, vector<1x16x96xbf16>
    %116 = vector.shape_cast %115 : vector<1x16x96xbf16> to vector<16x96xbf16>
    %c0_75 = arith.constant 0 : index
    %c0_76 = arith.constant 0 : index
    %117 = vector.load %arg7[%c0_75, %c0_76] : memref<96x256xbf16, #tpu.memory_space<vmem>>, vector<96x256xbf16>
    %cst_77 = arith.constant dense<0.000000e+00> : vector<16x256xf32>
    %118 = tpu.matmul %116, %117, %cst_77 {dimension_numbers = #tpu.dot_dimension_numbers<[1], [0], [0], [1], [0, 0, 1, 1], [], []>} : vector<16x96xbf16>, vector<96x256xbf16>, vector<16x256xf32> -> vector<16x256xf32>
    %119 = arith.addf %84, %118 : vector<16x256xf32>
    %c2_78 = arith.constant 2 : index
    %c0_79 = arith.constant 0 : index
    %c0_80 = arith.constant 0 : index
    %120 = vector.load %arg5[%c2_78, %c0_79, %c0_80] : memref<8x16x1xf32, #tpu.memory_space<vmem>>, vector<1x16x1xf32>
    %121 = vector.shape_cast %120 : vector<1x16x1xf32> to vector<16x1xf32>
    %122 = vector.broadcast %121 : vector<16x1xf32> to vector<16x256xf32>
    %123 = arith.addf %119, %122 : vector<16x256xf32>
    %c3 = arith.constant 3 : index
    %c0_81 = arith.constant 0 : index
    %c0_82 = arith.constant 0 : index
    %124 = vector.load %arg2[%c3, %c0_81, %c0_82] : memref<8x32x16xbf16, #tpu.memory_space<vmem>>, vector<1x32x16xbf16>
    %125 = vector.shape_cast %124 : vector<1x32x16xbf16> to vector<32x16xbf16>
    %126 = arith.truncf %123 : vector<16x256xf32> to vector<16x256xbf16>
    %cst_83 = arith.constant dense<0.000000e+00> : vector<32x256xf32>
    %127 = tpu.matmul %125, %126, %cst_83 {dimension_numbers = #tpu.dot_dimension_numbers<[1], [0], [0], [1], [0, 0, 1, 1], [], []>} : vector<32x16xbf16>, vector<16x256xbf16>, vector<32x256xf32> -> vector<32x256xf32>
    %c3_84 = arith.constant 3 : index
    %c0_85 = arith.constant 0 : index
    %c0_86 = arith.constant 0 : index
    %128 = vector.load %arg3[%c3_84, %c0_85, %c0_86] : memref<8x32x1xf32, #tpu.memory_space<vmem>>, vector<1x32x1xf32>
    %129 = vector.shape_cast %128 : vector<1x32x1xf32> to vector<32x1xf32>
    %130 = vector.broadcast %129 : vector<32x1xf32> to vector<32x256xf32>
    %131 = arith.addf %127, %130 : vector<32x256xf32>
    %c8_i32 = arith.constant 8 : i32
    %132 = vector.broadcast %c8_i32 : i32 to vector<1x256xi32>
    %133 = arith.cmpi sge, %6, %132 : vector<1x256xi32>
    %cst_87 = arith.constant 1.000000e+00 : f32
    %cst_88 = arith.constant 0.000000e+00 : f32
    %134 = vector.broadcast %cst_87 : f32 to vector<1x256xf32>
    %135 = vector.broadcast %cst_88 : f32 to vector<1x256xf32>
    %136 = arith.select %133, %134, %135 : vector<1x256xi1>, vector<1x256xf32>
    %c120_i32 = arith.constant 120 : i32
    %137 = vector.broadcast %c120_i32 : i32 to vector<1x256xi32>
    %138 = arith.cmpi slt, %6, %137 : vector<1x256xi32>
    %cst_89 = arith.constant 1.000000e+00 : f32
    %cst_90 = arith.constant 0.000000e+00 : f32
    %139 = vector.broadcast %cst_89 : f32 to vector<1x256xf32>
    %140 = vector.broadcast %cst_90 : f32 to vector<1x256xf32>
    %141 = arith.select %138, %139, %140 : vector<1x256xi1>, vector<1x256xf32>
    %c8_i32_91 = arith.constant 8 : i32
    %142 = tpu.dynamic_rotate %131 by %c8_i32_91 dim 1 : vector<32x256xf32>, i32 -> vector<32x256xf32>
    %143 = vector.broadcast %136 : vector<1x256xf32> to vector<32x256xf32>
    %144 = arith.mulf %142, %143 : vector<32x256xf32>
    %c248_i32 = arith.constant 248 : i32
    %145 = tpu.dynamic_rotate %131 by %c248_i32 dim 1 : vector<32x256xf32>, i32 -> vector<32x256xf32>
    %146 = vector.broadcast %141 : vector<1x256xf32> to vector<32x256xf32>
    %147 = arith.mulf %145, %146 : vector<32x256xf32>
    %148 = arith.truncf %144 : vector<32x256xf32> to vector<32x256xbf16>
    %c0_92 = arith.constant 0 : index
    %c0_93 = arith.constant 0 : index
    %149 = vector.load %arg7[%c0_92, %c0_93] : memref<96x256xbf16, #tpu.memory_space<vmem>>, vector<32x256xbf16>
    tpu.vector_store %arg7[%c0_92, %c0_93], %148 {strides = array<i32>} : memref<96x256xbf16, #tpu.memory_space<vmem>>, vector<32x256xbf16>,
    %150 = arith.truncf %131 : vector<32x256xf32> to vector<32x256xbf16>
    %c32_94 = arith.constant 32 : index
    %c0_95 = arith.constant 0 : index
    %151 = vector.load %arg7[%c32_94, %c0_95] : memref<96x256xbf16, #tpu.memory_space<vmem>>, vector<32x256xbf16>
    tpu.vector_store %arg7[%c32_94, %c0_95], %150 {strides = array<i32>} : memref<96x256xbf16, #tpu.memory_space<vmem>>, vector<32x256xbf16>,
    %152 = arith.truncf %147 : vector<32x256xf32> to vector<32x256xbf16>
    %c64_96 = arith.constant 64 : index
    %c0_97 = arith.constant 0 : index
    %153 = vector.load %arg7[%c64_96, %c0_97] : memref<96x256xbf16, #tpu.memory_space<vmem>>, vector<32x256xbf16>
    tpu.vector_store %arg7[%c64_96, %c0_97], %152 {strides = array<i32>} : memref<96x256xbf16, #tpu.memory_space<vmem>>, vector<32x256xbf16>,
    %c3_98 = arith.constant 3 : index
    %c0_99 = arith.constant 0 : index
    %c0_100 = arith.constant 0 : index
    %154 = vector.load %arg4[%c3_98, %c0_99, %c0_100] : memref<8x16x96xbf16, #tpu.memory_space<vmem>>, vector<1x16x96xbf16>
    %155 = vector.shape_cast %154 : vector<1x16x96xbf16> to vector<16x96xbf16>
    %c0_101 = arith.constant 0 : index
    %c0_102 = arith.constant 0 : index
    %156 = vector.load %arg7[%c0_101, %c0_102] : memref<96x256xbf16, #tpu.memory_space<vmem>>, vector<96x256xbf16>
    %cst_103 = arith.constant dense<0.000000e+00> : vector<16x256xf32>
    %157 = tpu.matmul %155, %156, %cst_103 {dimension_numbers = #tpu.dot_dimension_numbers<[1], [0], [0], [1], [0, 0, 1, 1], [], []>} : vector<16x96xbf16>, vector<96x256xbf16>, vector<16x256xf32> -> vector<16x256xf32>
    %158 = arith.addf %123, %157 : vector<16x256xf32>
    %c3_104 = arith.constant 3 : index
    %c0_105 = arith.constant 0 : index
    %c0_106 = arith.constant 0 : index
    %159 = vector.load %arg5[%c3_104, %c0_105, %c0_106] : memref<8x16x1xf32, #tpu.memory_space<vmem>>, vector<1x16x1xf32>
    %160 = vector.shape_cast %159 : vector<1x16x1xf32> to vector<16x1xf32>
    %161 = vector.broadcast %160 : vector<16x1xf32> to vector<16x256xf32>
    %162 = arith.addf %158, %161 : vector<16x256xf32>
    %c4 = arith.constant 4 : index
    %c0_107 = arith.constant 0 : index
    %c0_108 = arith.constant 0 : index
    %163 = vector.load %arg2[%c4, %c0_107, %c0_108] : memref<8x32x16xbf16, #tpu.memory_space<vmem>>, vector<1x32x16xbf16>
    %164 = vector.shape_cast %163 : vector<1x32x16xbf16> to vector<32x16xbf16>
    %165 = arith.truncf %162 : vector<16x256xf32> to vector<16x256xbf16>
    %cst_109 = arith.constant dense<0.000000e+00> : vector<32x256xf32>
    %166 = tpu.matmul %164, %165, %cst_109 {dimension_numbers = #tpu.dot_dimension_numbers<[1], [0], [0], [1], [0, 0, 1, 1], [], []>} : vector<32x16xbf16>, vector<16x256xbf16>, vector<32x256xf32> -> vector<32x256xf32>
    %c4_110 = arith.constant 4 : index
    %c0_111 = arith.constant 0 : index
    %c0_112 = arith.constant 0 : index
    %167 = vector.load %arg3[%c4_110, %c0_111, %c0_112] : memref<8x32x1xf32, #tpu.memory_space<vmem>>, vector<1x32x1xf32>
    %168 = vector.shape_cast %167 : vector<1x32x1xf32> to vector<32x1xf32>
    %169 = vector.broadcast %168 : vector<32x1xf32> to vector<32x256xf32>
    %170 = arith.addf %166, %169 : vector<32x256xf32>
    %c16_i32 = arith.constant 16 : i32
    %171 = vector.broadcast %c16_i32 : i32 to vector<1x256xi32>
    %172 = arith.cmpi sge, %6, %171 : vector<1x256xi32>
    %cst_113 = arith.constant 1.000000e+00 : f32
    %cst_114 = arith.constant 0.000000e+00 : f32
    %173 = vector.broadcast %cst_113 : f32 to vector<1x256xf32>
    %174 = vector.broadcast %cst_114 : f32 to vector<1x256xf32>
    %175 = arith.select %172, %173, %174 : vector<1x256xi1>, vector<1x256xf32>
    %c112_i32 = arith.constant 112 : i32
    %176 = vector.broadcast %c112_i32 : i32 to vector<1x256xi32>
    %177 = arith.cmpi slt, %6, %176 : vector<1x256xi32>
    %cst_115 = arith.constant 1.000000e+00 : f32
    %cst_116 = arith.constant 0.000000e+00 : f32
    %178 = vector.broadcast %cst_115 : f32 to vector<1x256xf32>
    %179 = vector.broadcast %cst_116 : f32 to vector<1x256xf32>
    %180 = arith.select %177, %178, %179 : vector<1x256xi1>, vector<1x256xf32>
    %c16_i32_117 = arith.constant 16 : i32
    %181 = tpu.dynamic_rotate %170 by %c16_i32_117 dim 1 : vector<32x256xf32>, i32 -> vector<32x256xf32>
    %182 = vector.broadcast %175 : vector<1x256xf32> to vector<32x256xf32>
    %183 = arith.mulf %181, %182 : vector<32x256xf32>
    %c240_i32 = arith.constant 240 : i32
    %184 = tpu.dynamic_rotate %170 by %c240_i32 dim 1 : vector<32x256xf32>, i32 -> vector<32x256xf32>
    %185 = vector.broadcast %180 : vector<1x256xf32> to vector<32x256xf32>
    %186 = arith.mulf %184, %185 : vector<32x256xf32>
    %187 = arith.truncf %183 : vector<32x256xf32> to vector<32x256xbf16>
    %c0_118 = arith.constant 0 : index
    %c0_119 = arith.constant 0 : index
    %188 = vector.load %arg7[%c0_118, %c0_119] : memref<96x256xbf16, #tpu.memory_space<vmem>>, vector<32x256xbf16>
    tpu.vector_store %arg7[%c0_118, %c0_119], %187 {strides = array<i32>} : memref<96x256xbf16, #tpu.memory_space<vmem>>, vector<32x256xbf16>,
    %189 = arith.truncf %170 : vector<32x256xf32> to vector<32x256xbf16>
    %c32_120 = arith.constant 32 : index
    %c0_121 = arith.constant 0 : index
    %190 = vector.load %arg7[%c32_120, %c0_121] : memref<96x256xbf16, #tpu.memory_space<vmem>>, vector<32x256xbf16>
    tpu.vector_store %arg7[%c32_120, %c0_121], %189 {strides = array<i32>} : memref<96x256xbf16, #tpu.memory_space<vmem>>, vector<32x256xbf16>,
    %191 = arith.truncf %186 : vector<32x256xf32> to vector<32x256xbf16>
    %c64_122 = arith.constant 64 : index
    %c0_123 = arith.constant 0 : index
    %192 = vector.load %arg7[%c64_122, %c0_123] : memref<96x256xbf16, #tpu.memory_space<vmem>>, vector<32x256xbf16>
    tpu.vector_store %arg7[%c64_122, %c0_123], %191 {strides = array<i32>} : memref<96x256xbf16, #tpu.memory_space<vmem>>, vector<32x256xbf16>,
    %c4_124 = arith.constant 4 : index
    %c0_125 = arith.constant 0 : index
    %c0_126 = arith.constant 0 : index
    %193 = vector.load %arg4[%c4_124, %c0_125, %c0_126] : memref<8x16x96xbf16, #tpu.memory_space<vmem>>, vector<1x16x96xbf16>
    %194 = vector.shape_cast %193 : vector<1x16x96xbf16> to vector<16x96xbf16>
    %c0_127 = arith.constant 0 : index
    %c0_128 = arith.constant 0 : index
    %195 = vector.load %arg7[%c0_127, %c0_128] : memref<96x256xbf16, #tpu.memory_space<vmem>>, vector<96x256xbf16>
    %cst_129 = arith.constant dense<0.000000e+00> : vector<16x256xf32>
    %196 = tpu.matmul %194, %195, %cst_129 {dimension_numbers = #tpu.dot_dimension_numbers<[1], [0], [0], [1], [0, 0, 1, 1], [], []>} : vector<16x96xbf16>, vector<96x256xbf16>, vector<16x256xf32> -> vector<16x256xf32>
    %197 = arith.addf %162, %196 : vector<16x256xf32>
    %c4_130 = arith.constant 4 : index
    %c0_131 = arith.constant 0 : index
    %c0_132 = arith.constant 0 : index
    %198 = vector.load %arg5[%c4_130, %c0_131, %c0_132] : memref<8x16x1xf32, #tpu.memory_space<vmem>>, vector<1x16x1xf32>
    %199 = vector.shape_cast %198 : vector<1x16x1xf32> to vector<16x1xf32>
    %200 = vector.broadcast %199 : vector<16x1xf32> to vector<16x256xf32>
    %201 = arith.addf %197, %200 : vector<16x256xf32>
    %c5 = arith.constant 5 : index
    %c0_133 = arith.constant 0 : index
    %c0_134 = arith.constant 0 : index
    %202 = vector.load %arg2[%c5, %c0_133, %c0_134] : memref<8x32x16xbf16, #tpu.memory_space<vmem>>, vector<1x32x16xbf16>
    %203 = vector.shape_cast %202 : vector<1x32x16xbf16> to vector<32x16xbf16>
    %204 = arith.truncf %201 : vector<16x256xf32> to vector<16x256xbf16>
    %cst_135 = arith.constant dense<0.000000e+00> : vector<32x256xf32>
    %205 = tpu.matmul %203, %204, %cst_135 {dimension_numbers = #tpu.dot_dimension_numbers<[1], [0], [0], [1], [0, 0, 1, 1], [], []>} : vector<32x16xbf16>, vector<16x256xbf16>, vector<32x256xf32> -> vector<32x256xf32>
    %c5_136 = arith.constant 5 : index
    %c0_137 = arith.constant 0 : index
    %c0_138 = arith.constant 0 : index
    %206 = vector.load %arg3[%c5_136, %c0_137, %c0_138] : memref<8x32x1xf32, #tpu.memory_space<vmem>>, vector<1x32x1xf32>
    %207 = vector.shape_cast %206 : vector<1x32x1xf32> to vector<32x1xf32>
    %208 = vector.broadcast %207 : vector<32x1xf32> to vector<32x256xf32>
    %209 = arith.addf %205, %208 : vector<32x256xf32>
    %c32_i32 = arith.constant 32 : i32
    %210 = vector.broadcast %c32_i32 : i32 to vector<1x256xi32>
    %211 = arith.cmpi sge, %6, %210 : vector<1x256xi32>
    %cst_139 = arith.constant 1.000000e+00 : f32
    %cst_140 = arith.constant 0.000000e+00 : f32
    %212 = vector.broadcast %cst_139 : f32 to vector<1x256xf32>
    %213 = vector.broadcast %cst_140 : f32 to vector<1x256xf32>
    %214 = arith.select %211, %212, %213 : vector<1x256xi1>, vector<1x256xf32>
    %c96_i32 = arith.constant 96 : i32
    %215 = vector.broadcast %c96_i32 : i32 to vector<1x256xi32>
    %216 = arith.cmpi slt, %6, %215 : vector<1x256xi32>
    %cst_141 = arith.constant 1.000000e+00 : f32
    %cst_142 = arith.constant 0.000000e+00 : f32
    %217 = vector.broadcast %cst_141 : f32 to vector<1x256xf32>
    %218 = vector.broadcast %cst_142 : f32 to vector<1x256xf32>
    %219 = arith.select %216, %217, %218 : vector<1x256xi1>, vector<1x256xf32>
    %c32_i32_143 = arith.constant 32 : i32
    %220 = tpu.dynamic_rotate %209 by %c32_i32_143 dim 1 : vector<32x256xf32>, i32 -> vector<32x256xf32>
    %221 = vector.broadcast %214 : vector<1x256xf32> to vector<32x256xf32>
    %222 = arith.mulf %220, %221 : vector<32x256xf32>
    %c224_i32 = arith.constant 224 : i32
    %223 = tpu.dynamic_rotate %209 by %c224_i32 dim 1 : vector<32x256xf32>, i32 -> vector<32x256xf32>
    %224 = vector.broadcast %219 : vector<1x256xf32> to vector<32x256xf32>
    %225 = arith.mulf %223, %224 : vector<32x256xf32>
    %226 = arith.truncf %222 : vector<32x256xf32> to vector<32x256xbf16>
    %c0_144 = arith.constant 0 : index
    %c0_145 = arith.constant 0 : index
    %227 = vector.load %arg7[%c0_144, %c0_145] : memref<96x256xbf16, #tpu.memory_space<vmem>>, vector<32x256xbf16>
    tpu.vector_store %arg7[%c0_144, %c0_145], %226 {strides = array<i32>} : memref<96x256xbf16, #tpu.memory_space<vmem>>, vector<32x256xbf16>,
    %228 = arith.truncf %209 : vector<32x256xf32> to vector<32x256xbf16>
    %c32_146 = arith.constant 32 : index
    %c0_147 = arith.constant 0 : index
    %229 = vector.load %arg7[%c32_146, %c0_147] : memref<96x256xbf16, #tpu.memory_space<vmem>>, vector<32x256xbf16>
    tpu.vector_store %arg7[%c32_146, %c0_147], %228 {strides = array<i32>} : memref<96x256xbf16, #tpu.memory_space<vmem>>, vector<32x256xbf16>,
    %230 = arith.truncf %225 : vector<32x256xf32> to vector<32x256xbf16>
    %c64_148 = arith.constant 64 : index
    %c0_149 = arith.constant 0 : index
    %231 = vector.load %arg7[%c64_148, %c0_149] : memref<96x256xbf16, #tpu.memory_space<vmem>>, vector<32x256xbf16>
    tpu.vector_store %arg7[%c64_148, %c0_149], %230 {strides = array<i32>} : memref<96x256xbf16, #tpu.memory_space<vmem>>, vector<32x256xbf16>,
    %c5_150 = arith.constant 5 : index
    %c0_151 = arith.constant 0 : index
    %c0_152 = arith.constant 0 : index
    %232 = vector.load %arg4[%c5_150, %c0_151, %c0_152] : memref<8x16x96xbf16, #tpu.memory_space<vmem>>, vector<1x16x96xbf16>
    %233 = vector.shape_cast %232 : vector<1x16x96xbf16> to vector<16x96xbf16>
    %c0_153 = arith.constant 0 : index
    %c0_154 = arith.constant 0 : index
    %234 = vector.load %arg7[%c0_153, %c0_154] : memref<96x256xbf16, #tpu.memory_space<vmem>>, vector<96x256xbf16>
    %cst_155 = arith.constant dense<0.000000e+00> : vector<16x256xf32>
    %235 = tpu.matmul %233, %234, %cst_155 {dimension_numbers = #tpu.dot_dimension_numbers<[1], [0], [0], [1], [0, 0, 1, 1], [], []>} : vector<16x96xbf16>, vector<96x256xbf16>, vector<16x256xf32> -> vector<16x256xf32>
    %236 = arith.addf %201, %235 : vector<16x256xf32>
    %c5_156 = arith.constant 5 : index
    %c0_157 = arith.constant 0 : index
    %c0_158 = arith.constant 0 : index
    %237 = vector.load %arg5[%c5_156, %c0_157, %c0_158] : memref<8x16x1xf32, #tpu.memory_space<vmem>>, vector<1x16x1xf32>
    %238 = vector.shape_cast %237 : vector<1x16x1xf32> to vector<16x1xf32>
    %239 = vector.broadcast %238 : vector<16x1xf32> to vector<16x256xf32>
    %240 = arith.addf %236, %239 : vector<16x256xf32>
    %c6 = arith.constant 6 : index
    %c0_159 = arith.constant 0 : index
    %c0_160 = arith.constant 0 : index
    %241 = vector.load %arg2[%c6, %c0_159, %c0_160] : memref<8x32x16xbf16, #tpu.memory_space<vmem>>, vector<1x32x16xbf16>
    %242 = vector.shape_cast %241 : vector<1x32x16xbf16> to vector<32x16xbf16>
    %243 = arith.truncf %240 : vector<16x256xf32> to vector<16x256xbf16>
    %cst_161 = arith.constant dense<0.000000e+00> : vector<32x256xf32>
    %244 = tpu.matmul %242, %243, %cst_161 {dimension_numbers = #tpu.dot_dimension_numbers<[1], [0], [0], [1], [0, 0, 1, 1], [], []>} : vector<32x16xbf16>, vector<16x256xbf16>, vector<32x256xf32> -> vector<32x256xf32>
    %c6_162 = arith.constant 6 : index
    %c0_163 = arith.constant 0 : index
    %c0_164 = arith.constant 0 : index
    %245 = vector.load %arg3[%c6_162, %c0_163, %c0_164] : memref<8x32x1xf32, #tpu.memory_space<vmem>>, vector<1x32x1xf32>
    %246 = vector.shape_cast %245 : vector<1x32x1xf32> to vector<32x1xf32>
    %247 = vector.broadcast %246 : vector<32x1xf32> to vector<32x256xf32>
    %248 = arith.addf %244, %247 : vector<32x256xf32>
    %c64_i32 = arith.constant 64 : i32
    %249 = vector.broadcast %c64_i32 : i32 to vector<1x256xi32>
    %250 = arith.cmpi sge, %6, %249 : vector<1x256xi32>
    %cst_165 = arith.constant 1.000000e+00 : f32
    %cst_166 = arith.constant 0.000000e+00 : f32
    %251 = vector.broadcast %cst_165 : f32 to vector<1x256xf32>
    %252 = vector.broadcast %cst_166 : f32 to vector<1x256xf32>
    %253 = arith.select %250, %251, %252 : vector<1x256xi1>, vector<1x256xf32>
    %c64_i32_167 = arith.constant 64 : i32
    %254 = vector.broadcast %c64_i32_167 : i32 to vector<1x256xi32>
    %255 = arith.cmpi slt, %6, %254 : vector<1x256xi32>
    %cst_168 = arith.constant 1.000000e+00 : f32
    %cst_169 = arith.constant 0.000000e+00 : f32
    %256 = vector.broadcast %cst_168 : f32 to vector<1x256xf32>
    %257 = vector.broadcast %cst_169 : f32 to vector<1x256xf32>
    %258 = arith.select %255, %256, %257 : vector<1x256xi1>, vector<1x256xf32>
    %c64_i32_170 = arith.constant 64 : i32
    %259 = tpu.dynamic_rotate %248 by %c64_i32_170 dim 1 : vector<32x256xf32>, i32 -> vector<32x256xf32>
    %260 = vector.broadcast %253 : vector<1x256xf32> to vector<32x256xf32>
    %261 = arith.mulf %259, %260 : vector<32x256xf32>
    %c192_i32 = arith.constant 192 : i32
    %262 = tpu.dynamic_rotate %248 by %c192_i32 dim 1 : vector<32x256xf32>, i32 -> vector<32x256xf32>
    %263 = vector.broadcast %258 : vector<1x256xf32> to vector<32x256xf32>
    %264 = arith.mulf %262, %263 : vector<32x256xf32>
    %265 = arith.truncf %261 : vector<32x256xf32> to vector<32x256xbf16>
    %c0_171 = arith.constant 0 : index
    %c0_172 = arith.constant 0 : index
    %266 = vector.load %arg7[%c0_171, %c0_172] : memref<96x256xbf16, #tpu.memory_space<vmem>>, vector<32x256xbf16>
    tpu.vector_store %arg7[%c0_171, %c0_172], %265 {strides = array<i32>} : memref<96x256xbf16, #tpu.memory_space<vmem>>, vector<32x256xbf16>,
    %267 = arith.truncf %248 : vector<32x256xf32> to vector<32x256xbf16>
    %c32_173 = arith.constant 32 : index
    %c0_174 = arith.constant 0 : index
    %268 = vector.load %arg7[%c32_173, %c0_174] : memref<96x256xbf16, #tpu.memory_space<vmem>>, vector<32x256xbf16>
    tpu.vector_store %arg7[%c32_173, %c0_174], %267 {strides = array<i32>} : memref<96x256xbf16, #tpu.memory_space<vmem>>, vector<32x256xbf16>,
    %269 = arith.truncf %264 : vector<32x256xf32> to vector<32x256xbf16>
    %c64_175 = arith.constant 64 : index
    %c0_176 = arith.constant 0 : index
    %270 = vector.load %arg7[%c64_175, %c0_176] : memref<96x256xbf16, #tpu.memory_space<vmem>>, vector<32x256xbf16>
    tpu.vector_store %arg7[%c64_175, %c0_176], %269 {strides = array<i32>} : memref<96x256xbf16, #tpu.memory_space<vmem>>, vector<32x256xbf16>,
    %c6_177 = arith.constant 6 : index
    %c0_178 = arith.constant 0 : index
    %c0_179 = arith.constant 0 : index
    %271 = vector.load %arg4[%c6_177, %c0_178, %c0_179] : memref<8x16x96xbf16, #tpu.memory_space<vmem>>, vector<1x16x96xbf16>
    %272 = vector.shape_cast %271 : vector<1x16x96xbf16> to vector<16x96xbf16>
    %c0_180 = arith.constant 0 : index
    %c0_181 = arith.constant 0 : index
    %273 = vector.load %arg7[%c0_180, %c0_181] : memref<96x256xbf16, #tpu.memory_space<vmem>>, vector<96x256xbf16>
    %cst_182 = arith.constant dense<0.000000e+00> : vector<16x256xf32>
    %274 = tpu.matmul %272, %273, %cst_182 {dimension_numbers = #tpu.dot_dimension_numbers<[1], [0], [0], [1], [0, 0, 1, 1], [], []>} : vector<16x96xbf16>, vector<96x256xbf16>, vector<16x256xf32> -> vector<16x256xf32>
    %275 = arith.addf %240, %274 : vector<16x256xf32>
    %c6_183 = arith.constant 6 : index
    %c0_184 = arith.constant 0 : index
    %c0_185 = arith.constant 0 : index
    %276 = vector.load %arg5[%c6_183, %c0_184, %c0_185] : memref<8x16x1xf32, #tpu.memory_space<vmem>>, vector<1x16x1xf32>
    %277 = vector.shape_cast %276 : vector<1x16x1xf32> to vector<16x1xf32>
    %278 = vector.broadcast %277 : vector<16x1xf32> to vector<16x256xf32>
    %279 = arith.addf %275, %278 : vector<16x256xf32>
    %c7 = arith.constant 7 : index
    %c0_186 = arith.constant 0 : index
    %c0_187 = arith.constant 0 : index
    %280 = vector.load %arg2[%c7, %c0_186, %c0_187] : memref<8x32x16xbf16, #tpu.memory_space<vmem>>, vector<1x32x16xbf16>
    %281 = vector.shape_cast %280 : vector<1x32x16xbf16> to vector<32x16xbf16>
    %282 = arith.truncf %279 : vector<16x256xf32> to vector<16x256xbf16>
    %cst_188 = arith.constant dense<0.000000e+00> : vector<32x256xf32>
    %283 = tpu.matmul %281, %282, %cst_188 {dimension_numbers = #tpu.dot_dimension_numbers<[1], [0], [0], [1], [0, 0, 1, 1], [], []>} : vector<32x16xbf16>, vector<16x256xbf16>, vector<32x256xf32> -> vector<32x256xf32>
    %c7_189 = arith.constant 7 : index
    %c0_190 = arith.constant 0 : index
    %c0_191 = arith.constant 0 : index
    %284 = vector.load %arg3[%c7_189, %c0_190, %c0_191] : memref<8x32x1xf32, #tpu.memory_space<vmem>>, vector<1x32x1xf32>
    %285 = vector.shape_cast %284 : vector<1x32x1xf32> to vector<32x1xf32>
    %286 = vector.broadcast %285 : vector<32x1xf32> to vector<32x256xf32>
    %287 = arith.addf %283, %286 : vector<32x256xf32>
    %c7_192 = arith.constant 7 : index
    %c0_193 = arith.constant 0 : index
    %c0_194 = arith.constant 0 : index
    %288 = vector.load %arg4[%c7_192, %c0_193, %c0_194] : memref<8x16x96xbf16, #tpu.memory_space<vmem>>, vector<1x16x96xbf16>
    %289 = vector.shape_cast %288 : vector<1x16x96xbf16> to vector<16x96xbf16>
    %290 = vector.extract_strided_slice %289 {offsets = [0, 32], sizes = [16, 32], strides = [1, 1]} : vector<16x96xbf16> to vector<16x32xbf16>
    %291 = arith.truncf %287 : vector<32x256xf32> to vector<32x256xbf16>
    %cst_195 = arith.constant dense<0.000000e+00> : vector<16x256xf32>
    %292 = tpu.matmul %290, %291, %cst_195 {dimension_numbers = #tpu.dot_dimension_numbers<[1], [0], [0], [1], [0, 0, 1, 1], [], []>} : vector<16x32xbf16>, vector<32x256xbf16>, vector<16x256xf32> -> vector<16x256xf32>
    %293 = arith.addf %279, %292 : vector<16x256xf32>
    %c7_196 = arith.constant 7 : index
    %c0_197 = arith.constant 0 : index
    %c0_198 = arith.constant 0 : index
    %294 = vector.load %arg5[%c7_196, %c0_197, %c0_198] : memref<8x16x1xf32, #tpu.memory_space<vmem>>, vector<1x16x1xf32>
    %295 = vector.shape_cast %294 : vector<1x16x1xf32> to vector<16x1xf32>
    %296 = vector.broadcast %295 : vector<16x1xf32> to vector<16x256xf32>
    %297 = arith.addf %293, %296 : vector<16x256xf32>
    %298 = vector.extract_strided_slice %297 {offsets = [0, 0], sizes = [16, 128], strides = [1, 1]} : vector<16x256xf32> to vector<16x128xf32>
    %c0_199 = arith.constant 0 : index
    %c0_200 = arith.constant 0 : index
    %c0_201 = arith.constant 0 : index
    %299 = vector.load %arg6[%c0_199, %c0_200, %c0_201] : memref<2x16x128xf32, #tpu.memory_space<vmem>>, vector<1x16x128xf32>
    %300 = vector.shape_cast %299 : vector<1x16x128xf32> to vector<16x128xf32>
    %301 = vector.shape_cast %298 : vector<16x128xf32> to vector<1x16x128xf32>
    tpu.vector_store %arg6[%c0_199, %c0_200, %c0_201], %301 {strides = array<i32>} : memref<2x16x128xf32, #tpu.memory_space<vmem>>, vector<1x16x128xf32>,
    %302 = vector.extract_strided_slice %297 {offsets = [0, 128], sizes = [16, 128], strides = [1, 1]} : vector<16x256xf32> to vector<16x128xf32>
    %c1_202 = arith.constant 1 : index
    %c0_203 = arith.constant 0 : index
    %c0_204 = arith.constant 0 : index
    %303 = vector.load %arg6[%c1_202, %c0_203, %c0_204] : memref<2x16x128xf32, #tpu.memory_space<vmem>>, vector<1x16x128xf32>
    %304 = vector.shape_cast %303 : vector<1x16x128xf32> to vector<16x128xf32>
    %305 = vector.shape_cast %302 : vector<16x128xf32> to vector<1x16x128xf32>
    tpu.vector_store %arg6[%c1_202, %c0_203, %c0_204], %305 {strides = array<i32>} : memref<2x16x128xf32, #tpu.memory_space<vmem>>, vector<1x16x128xf32>,
    return
  }
  func.func @transform_0(%arg0: i32) -> (i32, i32, i32) {
    %c0_i32 = arith.constant 0 : i32
    %c0_i32_0 = arith.constant 0 : i32
    %c0_i32_1 = arith.constant 0 : i32
    return %arg0, %c0_i32, %c0_i32_0 : i32, i32, i32
  }
  func.func @transform_1(%arg0: i32) -> (i32, i32, i32) {
    %c0_i32 = arith.constant 0 : i32
    %c0_i32_0 = arith.constant 0 : i32
    %c0_i32_1 = arith.constant 0 : i32
    %c0_i32_2 = arith.constant 0 : i32
    return %c0_i32, %c0_i32_0, %c0_i32_1 : i32, i32, i32
  }
  func.func @transform_2(%arg0: i32) -> (i32, i32, i32) {
    %c0_i32 = arith.constant 0 : i32
    %c0_i32_0 = arith.constant 0 : i32
    %c0_i32_1 = arith.constant 0 : i32
    %c0_i32_2 = arith.constant 0 : i32
    return %c0_i32, %c0_i32_0, %c0_i32_1 : i32, i32, i32
  }
  func.func @transform_3(%arg0: i32) -> (i32, i32, i32) {
    %c0_i32 = arith.constant 0 : i32
    %c0_i32_0 = arith.constant 0 : i32
    %c0_i32_1 = arith.constant 0 : i32
    %c0_i32_2 = arith.constant 0 : i32
    return %c0_i32, %c0_i32_0, %c0_i32_1 : i32, i32, i32
  }
  func.func @transform_4(%arg0: i32) -> (i32, i32, i32) {
    %c0_i32 = arith.constant 0 : i32
    %c0_i32_0 = arith.constant 0 : i32
    %c0_i32_1 = arith.constant 0 : i32
    %c0_i32_2 = arith.constant 0 : i32
    return %c0_i32, %c0_i32_0, %c0_i32_1 : i32, i32, i32
  }
  func.func @transform_5(%arg0: i32) -> (i32, i32, i32) {
    %c0_i32 = arith.constant 0 : i32
    %c0_i32_0 = arith.constant 0 : i32
    %c0_i32_1 = arith.constant 0 : i32
    return %arg0, %c0_i32, %c0_i32_0 : i32, i32, i32
  }
}

</mosaic_0001>

<llo_original>
// kernel: fwd.1
$region0: #{fwd.1}
  #allocation0 [shape = 'u32[]', space=smem, size = 0x4, offset = 0x4, fixed_abs, tag = 'smem constant byte address 0x4 - core index']
  #allocation1 [shape = 'u32[144,128]{1,0:T(1,128)}', space=vmem, size = 0x12000, scoped, tag = 'internal scratch']
  #allocation2 [shape = 'bf16[96,256]{1,0:T(16,128)(2,1)}', space=vmem, size = 0xc000, scoped, tag = 'scratch operand']
  %s0 = inlined_call_operand.hbm [shape: f32[2,16,128], index: 0, kind: input, shape index: {}, may-alias: {0,5}]
  %s1 = inlined_call_operand.vmem [shape: bf16[8,32,16], index: 1, kind: input, shape index: {}]
  %s2 = inlined_call_operand.vmem [shape: f32[8,32,1], index: 2, kind: input, shape index: {}]
  %s3 = inlined_call_operand.vmem [shape: bf16[8,16,96], index: 3, kind: input, shape index: {}]
  %s4 = inlined_call_operand.vmem [shape: f32[8,16,1], index: 4, kind: input, shape index: {}]
  %s5 = inlined_call_operand.hbm [shape: f32[2,16,128], index: 5, kind: output, shape index: {}, may-alias: {0,5}]
  %s6 = sld [smem:[#allocation0]]
  $region34: #{fwd.1} parent=0
    _
  %s8 = ssub.s32 1, %s6
  %s9 = scalar_select 0, %s8, %s6
  $region1: #{fwd.1} parent=0
    #allocation3 [shape = 'u8[16384]{0}', space=vmem, size = 0x4000, scoped, tag = 'input window, operand 0, single buffered']
    #allocation4 [shape = 's32[1]{0}', space=sflag, size = 0x4, scoped, tag = 'scoped memory for fwd.1']
    #allocation5 [shape = 's32[1]{0}', space=sflag, size = 0x4, scoped, tag = 'scoped memory for fwd.1']
    #allocation6 [shape = 'u8[16384]{0}', space=vmem, size = 0x4000, scoped, tag = 'output window, operand 0, single buffered']
    %10 = vsyncpa [#allocation4], 0
    %11 = vsyncpa [#allocation5], 0
    // Predicated region
    $region2: #{fwd.1} parent=1 // pred_check
      _
    $region3: #{fwd.1} parent=1 // pred_check_branch
      %13 = sbr.rel (0) target = $region5
    $region4: #{fwd.1} parent=1 // pred_region
      %s15 = ssub.s32 512, 512
      %16 = vsyncadd [#allocation4], %s15
      %s17 = sshll.u32 [#allocation3], 4
      %s18 = int_to_ptr.vmem [resolvable:$true] %s17
      %23 = dma.hbm_to_vmem [thread:$0]  %s0, 512, %s18, [#allocation4], 128, 128, 8
    $region5: #{fwd.1} parent=1 // pred_fallthru
      _
    // Predicated region
    $region6: #{fwd.1} parent=1 // pred_check
      _
    $region7: #{fwd.1} parent=1 // pred_check_branch
      %25 = sbr.rel (0) target = $region9
    $region8: #{fwd.1} parent=1 // pred_region
      _
    $region9: #{fwd.1} parent=1 // pred_fallthru
      _
    // Predicated region
    $region10: #{fwd.1} parent=1 // pred_check
      _
    $region11: #{fwd.1} parent=1 // pred_check_branch
      %27 = sbr.rel (0) target = $region13
    $region12: #{fwd.1} parent=1 // pred_region
      _
    $region13: #{fwd.1} parent=1 // pred_fallthru
      _
    // Predicated region
    $region14: #{fwd.1} parent=1 // pred_check
      _
    $region15: #{fwd.1} parent=1 // pred_check_branch
      %29 = sbr.rel (0) target = $region17
    $region16: #{fwd.1} parent=1 // pred_region
      _
    $region17: #{fwd.1} parent=1 // pred_fallthru
      _
    // Predicated region
    $region18: #{fwd.1} parent=1 // pred_check
      _
    $region19: #{fwd.1} parent=1 // pred_check_branch
      %31 = sbr.rel (0) target = $region21
    $region20: #{fwd.1} parent=1 // pred_region
      _
    $region21: #{fwd.1} parent=1 // pred_fallthru
      _
    // Predicated region
    $region22: #{fwd.1} parent=1 // pred_check
      _
    $region23: #{fwd.1} parent=1 // pred_check_branch
      %33 = sbr.rel (0) target = $region25
    $region24: #{fwd.1} parent=1 // pred_region
      %34 = dma.done [#allocation4], 512
    $region25: #{fwd.1} parent=1 // pred_fallthru
      _
    %v36 = vld [vmem:[#allocation3] sm:$0xff]
    %v37 = vld [vmem:[#allocation3 + $0x8] sm:$0xff]
    %s38 = scalar_lea.vmem [#allocation3], 16
    %v39 = vld [vmem:[%s38] sm:$0xff]
    %v40 = vld [vmem:[%s38 + $0x8] sm:$0xff]
    %v41 = vlaneseq
    %v42 = vand.u32 %v41, 127
    %v43 = vld [vmem:[%s1] sm:$0xf]
    %v44 = vld [vmem:[%s1 + $0x4] sm:$0xf]
    %v45 = vld [vmem:[%s1 + $0x8] sm:$0xf]
    %v46 = vld [vmem:[%s1 + $0xc] sm:$0xf]
    %v47 = vpack.c.bf16 %v37, %v36
    %v48 = vpack.c.bf16 %v40, %v39
    %v49 = vld [vmem:[%s2] sm:$0xff]
    %v50 = vld [vmem:[%s2 + $0x8] sm:$0xff]
    %v51 = vld [vmem:[%s2 + $0x10] sm:$0xff]
    %v52 = vld [vmem:[%s2 + $0x18] sm:$0xff]
    %54 = vset.pattern.permute.xlu0 0
    %55 = vperm.xlu0 %54, %v49
    %v56 = vpop.permute.xlu0 %55
    %59 = vset.pattern.permute.xlu0 0
    %60 = vperm.xlu0 %59, %v50
    %v61 = vpop.permute.xlu0 %60
    %64 = vset.pattern.permute.xlu0 0
    %65 = vperm.xlu0 %64, %v51
    %v66 = vpop.permute.xlu0 %65
    %69 = vset.pattern.permute.xlu0 0
    %70 = vperm.xlu0 %69, %v52
    %v71 = vpop.permute.xlu0 %70
    %v77 = vunpack.c.l.b16 %v43
    %v78 = vunpack.c.l.b16 %v44
    %v79 = vunpack.c.l.b16 %v45
    %v80 = vunpack.c.l.b16 %v46
    %v81 = vpack.c.b16 %v78, %v77
    %v82 = vpack.c.b16 %v80, %v79
    %vm83 = vcmask 130048
    %v85 = vsel %vm83, %v81, 0
    %v88 = vsel %vm83, %v82, 0
    %90 = vmatprep.subr.bf16.mxu0 %v48
    %91 = vmatpush1.bf16.msra.mxu0 %v47
    %92 = vmatprep.subr.bf16.mxu0 0
    %93 = vmatpush1.bf16.msra.mxu0 0
    %94 = vmatprep.subr.bf16.mxu0 0
    %95 = vmatpush1.bf16.msra.mxu0 0
    %96 = vmatprep.subr.bf16.mxu0 0
    %97 = vmatpush1.bf16.msra.mxu0 0
    %98 = vmatprep.subr.bf16.mxu0 0
    %99 = vmatpush1.bf16.msra.mxu0 0
    %100 = vmatprep.subr.bf16.mxu0 0
    %101 = vmatpush1.bf16.msra.mxu0 0
    %102 = vmatprep.subr.bf16.mxu0 0
    %103 = vmatpush1.bf16.msra.mxu0 0
    %104 = vmatprep.subr.bf16.mxu0 0
    %105 = vmatpush1.bf16.msra.mxu0 0
    %106 = vmatprep.subr.bf16.mxu0 0
    %107 = vmatpush1.bf16.msra.mxu0 0
    %108 = vmatprep.subr.bf16.mxu0 0
    %109 = vmatpush1.bf16.msra.mxu0 0
    %110 = vmatprep.subr.bf16.mxu0 0
    %111 = vmatpush1.bf16.msra.mxu0 0
    %112 = vmatprep.subr.bf16.mxu0 0
    %113 = vmatpush1.bf16.msra.mxu0 0
    %114 = vmatprep.subr.bf16.mxu0 0
    %115 = vmatpush1.bf16.msra.mxu0 0
    %116 = vmatprep.subr.bf16.mxu0 0
    %117 = vmatpush1.bf16.msra.mxu0 0
    %118 = vmatprep.subr.bf16.mxu0 0
    %119 = vmatpush1.bf16.msra.mxu0 0
    %120 = vmatprep.subr.bf16.mxu0 0
    %121 = vmatpush1.bf16.msra.mxu0 0
    %122 = vmatprep.mubr.bf16.mxu0 0
    %123 = vmatmul.mubr.bf16.gmra.mrb[0].mxu0 %v85
    %v124 = vpop.f32.mrb[0].mxu0
    %v125 = vadd.f32 %v56, %v124
    %v126 = vpop.f32.mrb[0].mxu0
    %v127 = vadd.f32 %v56, %v126
    %v128 = vpop.f32.mrb[0].mxu0
    %v129 = vadd.f32 %v61, %v128
    %v130 = vpop.f32.mrb[0].mxu0
    %v131 = vadd.f32 %v61, %v130
    %132 = vmatprep.mubr.bf16.mxu0 0
    %133 = vmatmul.mubr.bf16.gmra.mrb[0].mxu0 %v88
    %v134 = vpop.f32.mrb[0].mxu0
    %v135 = vadd.f32 %v66, %v134
    %v136 = vpop.f32.mrb[0].mxu0
    %v137 = vadd.f32 %v66, %v136
    %v138 = vpop.f32.mrb[0].mxu0
    %v139 = vadd.f32 %v71, %v138
    %v140 = vpop.f32.mrb[0].mxu0
    %v141 = vadd.f32 %v71, %v140
    %142 = vdwg.mxu0
    %vm143 = vcmp.ge.s32.totalorder %v42, 1
    %v144 = vsel %vm143, 1.0, 0.0
    %vm145 = vcmp.lt.s32.totalorder %v42, 127
    %v146 = vsel %vm145, 1.0, 0.0
    %147 = vrot.lane.b32.xlu0 %v125, 1
    %v148 = vpop.permute.xlu0 %147
    %149 = vrot.lane.b32.xlu0 %v129, 1
    %v150 = vpop.permute.xlu0 %149
    %151 = vrot.lane.b32.xlu0 %v135, 1
    %v152 = vpop.permute.xlu0 %151
    %153 = vrot.lane.b32.xlu0 %v139, 1
    %v154 = vpop.permute.xlu0 %153
    %155 = vrot.lane.b32.xlu0 %v127, 1
    %v156 = vpop.permute.xlu0 %155
    %157 = vrot.lane.b32.xlu0 %v131, 1
    %v158 = vpop.permute.xlu0 %157
    %159 = vrot.lane.b32.xlu0 %v137, 1
    %v160 = vpop.permute.xlu0 %159
    %161 = vrot.lane.b32.xlu0 %v141, 1
    %v162 = vpop.permute.xlu0 %161
    %vm163 = vcmp.lt.s32.totalorder %v42, 1
    %v164 = vsel %vm163, %v148, %v156
    %v165 = vsel %vm163, %v150, %v158
    %v166 = vsel %vm163, %v152, %v160
    %v167 = vsel %vm163, %v154, %v162
    %v168 = vsel %vm163, %v156, %v148
    %v169 = vsel %vm163, %v158, %v150
    %v170 = vsel %vm163, %v160, %v152
    %v171 = vsel %vm163, %v162, %v154
    %v172 = vlaneseq
    %v173 = vshrl.u32 %v172, 7
    %v174 = vsub.s32 0, %v173
    %v175 = vrot.slane %v144, %v174
    %v176 = vmul.f32 %v168, %v175
    %v177 = vmul.f32 %v164, %v175
    %v178 = vmul.f32 %v169, %v175
    %v179 = vmul.f32 %v165, %v175
    %v180 = vmul.f32 %v170, %v175
    %v181 = vmul.f32 %v166, %v175
    %v182 = vmul.f32 %v171, %v175
    %v183 = vmul.f32 %v167, %v175
    %184 = vrot.lane.b32.xlu0 %v125, 127
    %v185 = vpop.permute.xlu0 %184
    %186 = vrot.lane.b32.xlu0 %v129, 127
    %v187 = vpop.permute.xlu0 %186
    %188 = vrot.lane.b32.xlu0 %v135, 127
    %v189 = vpop.permute.xlu0 %188
    %190 = vrot.lane.b32.xlu0 %v139, 127
    %v191 = vpop.permute.xlu0 %190
    %192 = vrot.lane.b32.xlu0 %v127, 127
    %v193 = vpop.permute.xlu0 %192
    %194 = vrot.lane.b32.xlu0 %v131, 127
    %v195 = vpop.permute.xlu0 %194
    %196 = vrot.lane.b32.xlu0 %v137, 127
    %v197 = vpop.permute.xlu0 %196
    %198 = vrot.lane.b32.xlu0 %v141, 127
    %v199 = vpop.permute.xlu0 %198
    %v200 = vsel %vm145, %v185, %v193
    %v201 = vsel %vm145, %v187, %v195
    %v202 = vsel %vm145, %v189, %v197
    %v203 = vsel %vm145, %v191, %v199
    %v204 = vsel %vm145, %v193, %v185
    %v205 = vsel %vm145, %v195, %v187
    %v206 = vsel %vm145, %v197, %v189
    %v207 = vsel %vm145, %v199, %v191
    %v208 = vlaneseq
    %v209 = vshrl.u32 %v208, 7
    %v210 = vsub.s32 0, %v209
    %v211 = vrot.slane %v146, %v210
    %v212 = vmul.f32 %v200, %v211
    %v213 = vmul.f32 %v204, %v211
    %v214 = vmul.f32 %v201, %v211
    %v215 = vmul.f32 %v205, %v211
    %v216 = vmul.f32 %v202, %v211
    %v217 = vmul.f32 %v206, %v211
    %v218 = vmul.f32 %v203, %v211
    %v219 = vmul.f32 %v207, %v211
    %v220 = vpack.c.bf16 %v178, %v176
    %v221 = vpack.c.bf16 %v179, %v177
    %v222 = vpack.c.bf16 %v182, %v180
    %v223 = vpack.c.bf16 %v183, %v181
    %224 = vst [vmem:[#allocation2] sm:$0xff] %v220
    %225 = vst [vmem:[#allocation2 + $0x8] sm:$0xff] %v221
    %226 = vst [vmem:[#allocation2 + $0x10] sm:$0xff] %v222
    %227 = vst [vmem:[#allocation2 + $0x18] sm:$0xff] %v223
    %v228 = vpack.c.bf16 %v129, %v125
    %v229 = vpack.c.bf16 %v131, %v127
    %v230 = vpack.c.bf16 %v139, %v135
    %v231 = vpack.c.bf16 %v141, %v137
    %232 = vst [vmem:[#allocation2 + $0x20] sm:$0xff] %v228
    %233 = vst [vmem:[#allocation2 + $0x28] sm:$0xff] %v229
    %234 = vst [vmem:[#allocation2 + $0x30] sm:$0xff] %v230
    %235 = vst [vmem:[#allocation2 + $0x38] sm:$0xff] %v231
    %v236 = vpack.c.bf16 %v214, %v212
    %v237 = vpack.c.bf16 %v215, %v213
    %v238 = vpack.c.bf16 %v218, %v216
    %v239 = vpack.c.bf16 %v219, %v217
    %240 = vst [vmem:[#allocation2 + $0x40] sm:$0xff] %v236
    %241 = vst [vmem:[#allocation2 + $0x48] sm:$0xff] %v237
    %242 = vst [vmem:[#allocation2 + $0x50] sm:$0xff] %v238
    %243 = vst [vmem:[#allocation2 + $0x58] sm:$0xff] %v239
    %v244 = vld [vmem:[%s3] sm:$0xf]
    %v245 = vld [vmem:[%s3 + $0x4] sm:$0xf]
    %v246 = vld [vmem:[#allocation2] sm:$0xff]
    %v247 = vld [vmem:[#allocation2 + $0x8] sm:$0xff]
    %v248 = vld [vmem:[#allocation2 + $0x10] sm:$0xff]
    %v249 = vld [vmem:[#allocation2 + $0x18] sm:$0xff]
    %v250 = vld [vmem:[#allocation2 + $0x20] sm:$0xff]
    %v251 = vld [vmem:[#allocation2 + $0x28] sm:$0xff]
    %v252 = vld [vmem:[#allocation2 + $0x30] sm:$0xff]
    %v253 = vld [vmem:[#allocation2 + $0x38] sm:$0xff]
    %v254 = vld [vmem:[#allocation2 + $0x40] sm:$0xff]
    %v255 = vld [vmem:[#allocation2 + $0x48] sm:$0xff]
    %v256 = vld [vmem:[#allocation2 + $0x50] sm:$0xff]
    %v257 = vld [vmem:[#allocation2 + $0x58] sm:$0xff]
    %v260 = vunpack.c.l.b16 %v244
    %v261 = vunpack.c.l.b16 %v245
    %v262 = vpack.c.b16 %v261, %v260
    %vm263 = vcmask 785408
    %v265 = vsel %vm263, %v262, 0
    %267 = vmatprep.subr.bf16.mxu0 %v247
    %268 = vmatpush1.bf16.msra.mxu0 %v246
    %269 = vmatprep.subr.bf16.mxu0 %v249
    %270 = vmatpush1.bf16.msra.mxu0 %v248
    %271 = vmatprep.subr.bf16.mxu0 %v251
    %272 = vmatpush1.bf16.msra.mxu0 %v250
    %273 = vmatprep.subr.bf16.mxu0 %v253
    %274 = vmatpush1.bf16.msra.mxu0 %v252
    %275 = vmatprep.subr.bf16.mxu0 %v255
    %276 = vmatpush1.bf16.msra.mxu0 %v254
    %277 = vmatprep.subr.bf16.mxu0 %v257
    %278 = vmatpush1.bf16.msra.mxu0 %v256
    %279 = vmatprep.subr.bf16.mxu0 0
    %280 = vmatpush1.bf16.msra.mxu0 0
    %281 = vmatprep.subr.bf16.mxu0 0
    %282 = vmatpush1.bf16.msra.mxu0 0
    %283 = vmatprep.subr.bf16.mxu0 0
    %284 = vmatpush1.bf16.msra.mxu0 0
    %285 = vmatprep.subr.bf16.mxu0 0
    %286 = vmatpush1.bf16.msra.mxu0 0
    %287 = vmatprep.subr.bf16.mxu0 0
    %288 = vmatpush1.bf16.msra.mxu0 0
    %289 = vmatprep.subr.bf16.mxu0 0
    %290 = vmatpush1.bf16.msra.mxu0 0
    %291 = vmatprep.subr.bf16.mxu0 0
    %292 = vmatpush1.bf16.msra.mxu0 0
    %293 = vmatprep.subr.bf16.mxu0 0
    %294 = vmatpush1.bf16.msra.mxu0 0
    %295 = vmatprep.subr.bf16.mxu0 0
    %296 = vmatpush1.bf16.msra.mxu0 0
    %297 = vmatprep.subr.bf16.mxu0 0
    %298 = vmatpush1.bf16.msra.mxu0 0
    %299 = vmatprep.mubr.bf16.mxu0 0
    %300 = vmatmul.mubr.bf16.gmra.mrb[0].mxu0 %v265
    %v301 = vpop.f32.mrb[0].mxu0
    %v302 = vadd.f32 0.0, %v301
    %v303 = vpop.f32.mrb[0].mxu0
    %v304 = vadd.f32 0.0, %v303
    %v305 = vpop.f32.mrb[0].mxu0
    %v306 = vadd.f32 0.0, %v305
    %v307 = vpop.f32.mrb[0].mxu0
    %v308 = vadd.f32 0.0, %v307
    %309 = vdwg.mxu0
    %v310 = vadd.f32 %v36, %v302
    %v311 = vadd.f32 %v39, %v304
    %v312 = vadd.f32 %v37, %v306
    %v313 = vadd.f32 %v40, %v308
    %v314 = vld [vmem:[%s4] sm:$0xff]
    %v315 = vld [vmem:[%s4 + $0x8] sm:$0xff]
    %317 = vset.pattern.permute.xlu0 0
    %318 = vperm.xlu0 %317, %v314
    %v319 = vpop.permute.xlu0 %318
    %322 = vset.pattern.permute.xlu0 0
    %323 = vperm.xlu0 %322, %v315
    %v324 = vpop.permute.xlu0 %323
    %v326 = vadd.f32 %v310, %v319
    %v327 = vadd.f32 %v311, %v319
    %v328 = vadd.f32 %v312, %v324
    %v329 = vadd.f32 %v313, %v324
    %s330 = scalar_lea.vmem %s1, 16
    %v331 = vld [vmem:[%s330] sm:$0xf]
    %v332 = vld [vmem:[%s330 + $0x4] sm:$0xf]
    %v333 = vld [vmem:[%s330 + $0x8] sm:$0xf]
    %v334 = vld [vmem:[%s330 + $0xc] sm:$0xf]
    %v335 = vpack.c.bf16 %v328, %v326
    %v336 = vpack.c.bf16 %v329, %v327
    %s337 = scalar_lea.vmem %s2, 32
    %v338 = vld [vmem:[%s337] sm:$0xff]
    %v339 = vld [vmem:[%s337 + $0x8] sm:$0xff]
    %v340 = vld [vmem:[%s337 + $0x10] sm:$0xff]
    %v341 = vld [vmem:[%s337 + $0x18] sm:$0xff]
    %343 = vset.pattern.permute.xlu0 0
    %344 = vperm.xlu0 %343, %v338
    %v345 = vpop.permute.xlu0 %344
    %348 = vset.pattern.permute.xlu0 0
    %349 = vperm.xlu0 %348, %v339
    %v350 = vpop.permute.xlu0 %349
    %353 = vset.pattern.permute.xlu0 0
    %354 = vperm.xlu0 %353, %v340
    %v355 = vpop.permute.xlu0 %354
    %358 = vset.pattern.permute.xlu0 0
    %359 = vperm.xlu0 %358, %v341
    %v360 = vpop.permute.xlu0 %359
    %v366 = vunpack.c.l.b16 %v331
    %v367 = vunpack.c.l.b16 %v332
    %v368 = vunpack.c.l.b16 %v333
    %v369 = vunpack.c.l.b16 %v334
    %v370 = vpack.c.b16 %v367, %v366
    %v371 = vpack.c.b16 %v369, %v368
    %v373 = vsel %vm83, %v370, 0
    %v376 = vsel %vm83, %v371, 0
    %378 = vmatprep.subr.bf16.mxu0 %v336
    %379 = vmatpush1.bf16.msra.mxu0 %v335
    %380 = vmatprep.subr.bf16.mxu0 0
    %381 = vmatpush1.bf16.msra.mxu0 0
    %382 = vmatprep.subr.bf16.mxu0 0
    %383 = vmatpush1.bf16.msra.mxu0 0
    %384 = vmatprep.subr.bf16.mxu0 0
    %385 = vmatpush1.bf16.msra.mxu0 0
    %386 = vmatprep.subr.bf16.mxu0 0
    %387 = vmatpush1.bf16.msra.mxu0 0
    %388 = vmatprep.subr.bf16.mxu0 0
    %389 = vmatpush1.bf16.msra.mxu0 0
    %390 = vmatprep.subr.bf16.mxu0 0
    %391 = vmatpush1.bf16.msra.mxu0 0
    %392 = vmatprep.subr.bf16.mxu0 0
    %393 = vmatpush1.bf16.msra.mxu0 0
    %394 = vmatprep.subr.bf16.mxu0 0
    %395 = vmatpush1.bf16.msra.mxu0 0
    %396 = vmatprep.subr.bf16.mxu0 0
    %397 = vmatpush1.bf16.msra.mxu0 0
    %398 = vmatprep.subr.bf16.mxu0 0
    %399 = vmatpush1.bf16.msra.mxu0 0
    %400 = vmatprep.subr.bf16.mxu0 0
    %401 = vmatpush1.bf16.msra.mxu0 0
    %402 = vmatprep.subr.bf16.mxu0 0
    %403 = vmatpush1.bf16.msra.mxu0 0
    %404 = vmatprep.subr.bf16.mxu0 0
    %405 = vmatpush1.bf16.msra.mxu0 0
    %406 = vmatprep.subr.bf16.mxu0 0
    %407 = vmatpush1.bf16.msra.mxu0 0
    %408 = vmatprep.subr.bf16.mxu0 0
    %409 = vmatpush1.bf16.msra.mxu0 0
    %410 = vmatprep.mubr.bf16.mxu0 0
    %411 = vmatmul.mubr.bf16.gmra.mrb[0].mxu0 %v373
    %v412 = vpop.f32.mrb[0].mxu0
    %v413 = vadd.f32 %v345, %v412
    %v414 = vpop.f32.mrb[0].mxu0
    %v415 = vadd.f32 %v345, %v414
    %v416 = vpop.f32.mrb[0].mxu0
    %v417 = vadd.f32 %v350, %v416
    %v418 = vpop.f32.mrb[0].mxu0
    %v419 = vadd.f32 %v350, %v418
    %420 = vmatprep.mubr.bf16.mxu0 0
    %421 = vmatmul.mubr.bf16.gmra.mrb[0].mxu0 %v376
    %v422 = vpop.f32.mrb[0].mxu0
    %v423 = vadd.f32 %v355, %v422
    %v424 = vpop.f32.mrb[0].mxu0
    %v425 = vadd.f32 %v355, %v424
    %v426 = vpop.f32.mrb[0].mxu0
    %v427 = vadd.f32 %v360, %v426
    %v428 = vpop.f32.mrb[0].mxu0
    %v429 = vadd.f32 %v360, %v428
    %430 = vdwg.mxu0
    %vm431 = vcmp.ge.s32.totalorder %v42, 2
    %v432 = vsel %vm431, 1.0, 0.0
    %vm433 = vcmp.lt.s32.totalorder %v42, 126
    %v434 = vsel %vm433, 1.0, 0.0
    %435 = vrot.lane.b32.xlu0 %v413, 2
    %v436 = vpop.permute.xlu0 %435
    %437 = vrot.lane.b32.xlu0 %v417, 2
    %v438 = vpop.permute.xlu0 %437
    %439 = vrot.lane.b32.xlu0 %v423, 2
    %v440 = vpop.permute.xlu0 %439
    %441 = vrot.lane.b32.xlu0 %v427, 2
    %v442 = vpop.permute.xlu0 %441
    %443 = vrot.lane.b32.xlu0 %v415, 2
    %v444 = vpop.permute.xlu0 %443
    %445 = vrot.lane.b32.xlu0 %v419, 2
    %v446 = vpop.permute.xlu0 %445
    %447 = vrot.lane.b32.xlu0 %v425, 2
    %v448 = vpop.permute.xlu0 %447
    %449 = vrot.lane.b32.xlu0 %v429, 2
    %v450 = vpop.permute.xlu0 %449
    %vm451 = vcmp.lt.s32.totalorder %v42, 2
    %v452 = vsel %vm451, %v436, %v444
    %v453 = vsel %vm451, %v438, %v446
    %v454 = vsel %vm451, %v440, %v448
    %v455 = vsel %vm451, %v442, %v450
    %v456 = vsel %vm451, %v444, %v436
    %v457 = vsel %vm451, %v446, %v438
    %v458 = vsel %vm451, %v448, %v440
    %v459 = vsel %vm451, %v450, %v442
    %v460 = vlaneseq
    %v461 = vshrl.u32 %v460, 7
    %v462 = vsub.s32 0, %v461
    %v463 = vrot.slane %v432, %v462
    %v464 = vmul.f32 %v456, %v463
    %v465 = vmul.f32 %v452, %v463
    %v466 = vmul.f32 %v457, %v463
    %v467 = vmul.f32 %v453, %v463
    %v468 = vmul.f32 %v458, %v463
    %v469 = vmul.f32 %v454, %v463
    %v470 = vmul.f32 %v459, %v463
    %v471 = vmul.f32 %v455, %v463
    %472 = vrot.lane.b32.xlu0 %v413, 126
    %v473 = vpop.permute.xlu0 %472
    %474 = vrot.lane.b32.xlu0 %v417, 126
    %v475 = vpop.permute.xlu0 %474
    %476 = vrot.lane.b32.xlu0 %v423, 126
    %v477 = vpop.permute.xlu0 %476
    %478 = vrot.lane.b32.xlu0 %v427, 126
    %v479 = vpop.permute.xlu0 %478
    %480 = vrot.lane.b32.xlu0 %v415, 126
    %v481 = vpop.permute.xlu0 %480
    %482 = vrot.lane.b32.xlu0 %v419, 126
    %v483 = vpop.permute.xlu0 %482
    %484 = vrot.lane.b32.xlu0 %v425, 126
    %v485 = vpop.permute.xlu0 %484
    %486 = vrot.lane.b32.xlu0 %v429, 126
    %v487 = vpop.permute.xlu0 %486
    %v488 = vsel %vm433, %v473, %v481
    %v489 = vsel %vm433, %v475, %v483
    %v490 = vsel %vm433, %v477, %v485
    %v491 = vsel %vm433, %v479, %v487
    %v492 = vsel %vm433, %v481, %v473
    %v493 = vsel %vm433, %v483, %v475
    %v494 = vsel %vm433, %v485, %v477
    %v495 = vsel %vm433, %v487, %v479
    %v496 = vlaneseq
    %v497 = vshrl.u32 %v496, 7
    %v498 = vsub.s32 0, %v497
    %v499 = vrot.slane %v434, %v498
    %v500 = vmul.f32 %v488, %v499
    %v501 = vmul.f32 %v492, %v499
    %v502 = vmul.f32 %v489, %v499
    %v503 = vmul.f32 %v493, %v499
    %v504 = vmul.f32 %v490, %v499
    %v505 = vmul.f32 %v494, %v499
    %v506 = vmul.f32 %v491, %v499
    %v507 = vmul.f32 %v495, %v499
    %v508 = vpack.c.bf16 %v466, %v464
    %v509 = vpack.c.bf16 %v467, %v465
    %v510 = vpack.c.bf16 %v470, %v468
    %v511 = vpack.c.bf16 %v471, %v469
    %512 = vst [vmem:[#allocation2] sm:$0xff] %v508
    %513 = vst [vmem:[#allocation2 + $0x8] sm:$0xff] %v509
    %514 = vst [vmem:[#allocation2 + $0x10] sm:$0xff] %v510
    %515 = vst [vmem:[#allocation2 + $0x18] sm:$0xff] %v511
    %v516 = vpack.c.bf16 %v417, %v413
    %v517 = vpack.c.bf16 %v419, %v415
    %v518 = vpack.c.bf16 %v427, %v423
    %v519 = vpack.c.bf16 %v429, %v425
    %520 = vst [vmem:[#allocation2 + $0x20] sm:$0xff] %v516
    %521 = vst [vmem:[#allocation2 + $0x28] sm:$0xff] %v517
    %522 = vst [vmem:[#allocation2 + $0x30] sm:$0xff] %v518
    %523 = vst [vmem:[#allocation2 + $0x38] sm:$0xff] %v519
    %v524 = vpack.c.bf16 %v502, %v500
    %v525 = vpack.c.bf16 %v503, %v501
    %v526 = vpack.c.bf16 %v506, %v504
    %v527 = vpack.c.bf16 %v507, %v505
    %528 = vst [vmem:[#allocation2 + $0x40] sm:$0xff] %v524
    %529 = vst [vmem:[#allocation2 + $0x48] sm:$0xff] %v525
    %530 = vst [vmem:[#allocation2 + $0x50] sm:$0xff] %v526
    %531 = vst [vmem:[#allocation2 + $0x58] sm:$0xff] %v527
    %s532 = scalar_lea.vmem %s3, 8
    %v533 = vld [vmem:[%s532] sm:$0xf]
    %v534 = vld [vmem:[%s532 + $0x4] sm:$0xf]
    %v535 = vld [vmem:[#allocation2] sm:$0xff]
    %v536 = vld [vmem:[#allocation2 + $0x8] sm:$0xff]
    %v537 = vld [vmem:[#allocation2 + $0x10] sm:$0xff]
    %v538 = vld [vmem:[#allocation2 + $0x18] sm:$0xff]
    %v539 = vld [vmem:[#allocation2 + $0x20] sm:$0xff]
    %v540 = vld [vmem:[#allocation2 + $0x28] sm:$0xff]
    %v541 = vld [vmem:[#allocation2 + $0x30] sm:$0xff]
    %v542 = vld [vmem:[#allocation2 + $0x38] sm:$0xff]
    %v543 = vld [vmem:[#allocation2 + $0x40] sm:$0xff]
    %v544 = vld [vmem:[#allocation2 + $0x48] sm:$0xff]
    %v545 = vld [vmem:[#allocation2 + $0x50] sm:$0xff]
    %v546 = vld [vmem:[#allocation2 + $0x58] sm:$0xff]
    %v549 = vunpack.c.l.b16 %v533
    %v550 = vunpack.c.l.b16 %v534
    %v551 = vpack.c.b16 %v550, %v549
    %v553 = vsel %vm263, %v551, 0
    %555 = vmatprep.subr.bf16.mxu0 %v536
    %556 = vmatpush1.bf16.msra.mxu0 %v535
    %557 = vmatprep.subr.bf16.mxu0 %v538
    %558 = vmatpush1.bf16.msra.mxu0 %v537
    %559 = vmatprep.subr.bf16.mxu0 %v540
    %560 = vmatpush1.bf16.msra.mxu0 %v539
    %561 = vmatprep.subr.bf16.mxu0 %v542
    %562 = vmatpush1.bf16.msra.mxu0 %v541
    %563 = vmatprep.subr.bf16.mxu0 %v544
    %564 = vmatpush1.bf16.msra.mxu0 %v543
    %565 = vmatprep.subr.bf16.mxu0 %v546
    %566 = vmatpush1.bf16.msra.mxu0 %v545
    %567 = vmatprep.subr.bf16.mxu0 0
    %568 = vmatpush1.bf16.msra.mxu0 0
    %569 = vmatprep.subr.bf16.mxu0 0
    %570 = vmatpush1.bf16.msra.mxu0 0
    %571 = vmatprep.subr.bf16.mxu0 0
    %572 = vmatpush1.bf16.msra.mxu0 0
    %573 = vmatprep.subr.bf16.mxu0 0
    %574 = vmatpush1.bf16.msra.mxu0 0
    %575 = vmatprep.subr.bf16.mxu0 0
    %576 = vmatpush1.bf16.msra.mxu0 0
    %577 = vmatprep.subr.bf16.mxu0 0
    %578 = vmatpush1.bf16.msra.mxu0 0
    %579 = vmatprep.subr.bf16.mxu0 0
    %580 = vmatpush1.bf16.msra.mxu0 0
    %581 = vmatprep.subr.bf16.mxu0 0
    %582 = vmatpush1.bf16.msra.mxu0 0
    %583 = vmatprep.subr.bf16.mxu0 0
    %584 = vmatpush1.bf16.msra.mxu0 0
    %585 = vmatprep.subr.bf16.mxu0 0
    %586 = vmatpush1.bf16.msra.mxu0 0
    %587 = vmatprep.mubr.bf16.mxu0 0
    %588 = vmatmul.mubr.bf16.gmra.mrb[0].mxu0 %v553
    %v589 = vpop.f32.mrb[0].mxu0
    %v590 = vadd.f32 0.0, %v589
    %v591 = vpop.f32.mrb[0].mxu0
    %v592 = vadd.f32 0.0, %v591
    %v593 = vpop.f32.mrb[0].mxu0
    %v594 = vadd.f32 0.0, %v593
    %v595 = vpop.f32.mrb[0].mxu0
    %v596 = vadd.f32 0.0, %v595
    %597 = vdwg.mxu0
    %v598 = vadd.f32 %v326, %v590
    %v599 = vadd.f32 %v327, %v592
    %v600 = vadd.f32 %v328, %v594
    %v601 = vadd.f32 %v329, %v596
    %s602 = scalar_lea.vmem %s4, 16
    %v603 = vld [vmem:[%s602] sm:$0xff]
    %v604 = vld [vmem:[%s602 + $0x8] sm:$0xff]
    %606 = vset.pattern.permute.xlu0 0
    %607 = vperm.xlu0 %606, %v603
    %v608 = vpop.permute.xlu0 %607
    %611 = vset.pattern.permute.xlu0 0
    %612 = vperm.xlu0 %611, %v604
    %v613 = vpop.permute.xlu0 %612
    %v615 = vadd.f32 %v598, %v608
    %v616 = vadd.f32 %v599, %v608
    %v617 = vadd.f32 %v600, %v613
    %v618 = vadd.f32 %v601, %v613
    %s619 = scalar_lea.vmem %s1, 32
    %v620 = vld [vmem:[%s619] sm:$0xf]
    %v621 = vld [vmem:[%s619 + $0x4] sm:$0xf]
    %v622 = vld [vmem:[%s619 + $0x8] sm:$0xf]
    %v623 = vld [vmem:[%s619 + $0xc] sm:$0xf]
    %v624 = vpack.c.bf16 %v617, %v615
    %v625 = vpack.c.bf16 %v618, %v616
    %s626 = scalar_lea.vmem %s2, 64
    %v627 = vld [vmem:[%s626] sm:$0xff]
    %v628 = vld [vmem:[%s626 + $0x8] sm:$0xff]
    %v629 = vld [vmem:[%s626 + $0x10] sm:$0xff]
    %v630 = vld [vmem:[%s626 + $0x18] sm:$0xff]
    %632 = vset.pattern.permute.xlu0 0
    %633 = vperm.xlu0 %632, %v627
    %v634 = vpop.permute.xlu0 %633
    %637 = vset.pattern.permute.xlu0 0
    %638 = vperm.xlu0 %637, %v628
    %v639 = vpop.permute.xlu0 %638
    %642 = vset.pattern.permute.xlu0 0
    %643 = vperm.xlu0 %642, %v629
    %v644 = vpop.permute.xlu0 %643
    %647 = vset.pattern.permute.xlu0 0
    %648 = vperm.xlu0 %647, %v630
    %v649 = vpop.permute.xlu0 %648
    %v655 = vunpack.c.l.b16 %v620
    %v656 = vunpack.c.l.b16 %v621
    %v657 = vunpack.c.l.b16 %v622
    %v658 = vunpack.c.l.b16 %v623
    %v659 = vpack.c.b16 %v656, %v655
    %v660 = vpack.c.b16 %v658, %v657
    %v662 = vsel %vm83, %v659, 0
    %v665 = vsel %vm83, %v660, 0
    %667 = vmatprep.subr.bf16.mxu0 %v625
    %668 = vmatpush1.bf16.msra.mxu0 %v624
    %669 = vmatprep.subr.bf16.mxu0 0
    %670 = vmatpush1.bf16.msra.mxu0 0
    %671 = vmatprep.subr.bf16.mxu0 0
    %672 = vmatpush1.bf16.msra.mxu0 0
    %673 = vmatprep.subr.bf16.mxu0 0
    %674 = vmatpush1.bf16.msra.mxu0 0
    %675 = vmatprep.subr.bf16.mxu0 0
    %676 = vmatpush1.bf16.msra.mxu0 0
    %677 = vmatprep.subr.bf16.mxu0 0
    %678 = vmatpush1.bf16.msra.mxu0 0
    %679 = vmatprep.subr.bf16.mxu0 0
    %680 = vmatpush1.bf16.msra.mxu0 0
    %681 = vmatprep.subr.bf16.mxu0 0
    %682 = vmatpush1.bf16.msra.mxu0 0
    %683 = vmatprep.subr.bf16.mxu0 0
    %684 = vmatpush1.bf16.msra.mxu0 0
    %685 = vmatprep.subr.bf16.mxu0 0
    %686 = vmatpush1.bf16.msra.mxu0 0
    %687 = vmatprep.subr.bf16.mxu0 0
    %688 = vmatpush1.bf16.msra.mxu0 0
    %689 = vmatprep.subr.bf16.mxu0 0
    %690 = vmatpush1.bf16.msra.mxu0 0
    %691 = vmatprep.subr.bf16.mxu0 0
    %692 = vmatpush1.bf16.msra.mxu0 0
    %693 = vmatprep.subr.bf16.mxu0 0
    %694 = vmatpush1.bf16.msra.mxu0 0
    %695 = vmatprep.subr.bf16.mxu0 0
    %696 = vmatpush1.bf16.msra.mxu0 0
    %697 = vmatprep.subr.bf16.mxu0 0
    %698 = vmatpush1.bf16.msra.mxu0 0
    %699 = vmatprep.mubr.bf16.mxu0 0
    %700 = vmatmul.mubr.bf16.gmra.mrb[0].mxu0 %v662
    %v701 = vpop.f32.mrb[0].mxu0
    %v702 = vadd.f32 %v634, %v701
    %v703 = vpop.f32.mrb[0].mxu0
    %v704 = vadd.f32 %v634, %v703
    %v705 = vpop.f32.mrb[0].mxu0
    %v706 = vadd.f32 %v639, %v705
    %v707 = vpop.f32.mrb[0].mxu0
    %v708 = vadd.f32 %v639, %v707
    %709 = vmatprep.mubr.bf16.mxu0 0
    %710 = vmatmul.mubr.bf16.gmra.mrb[0].mxu0 %v665
    %v711 = vpop.f32.mrb[0].mxu0
    %v712 = vadd.f32 %v644, %v711
    %v713 = vpop.f32.mrb[0].mxu0
    %v714 = vadd.f32 %v644, %v713
    %v715 = vpop.f32.mrb[0].mxu0
    %v716 = vadd.f32 %v649, %v715
    %v717 = vpop.f32.mrb[0].mxu0
    %v718 = vadd.f32 %v649, %v717
    %719 = vdwg.mxu0
    %vm720 = vcmp.ge.s32.totalorder %v42, 4
    %v721 = vsel %vm720, 1.0, 0.0
    %vm722 = vcmp.lt.s32.totalorder %v42, 124
    %v723 = vsel %vm722, 1.0, 0.0
    %724 = vrot.lane.b32.xlu0 %v702, 4
    %v725 = vpop.permute.xlu0 %724
    %726 = vrot.lane.b32.xlu0 %v706, 4
    %v727 = vpop.permute.xlu0 %726
    %728 = vrot.lane.b32.xlu0 %v712, 4
    %v729 = vpop.permute.xlu0 %728
    %730 = vrot.lane.b32.xlu0 %v716, 4
    %v731 = vpop.permute.xlu0 %730
    %732 = vrot.lane.b32.xlu0 %v704, 4
    %v733 = vpop.permute.xlu0 %732
    %734 = vrot.lane.b32.xlu0 %v708, 4
    %v735 = vpop.permute.xlu0 %734
    %736 = vrot.lane.b32.xlu0 %v714, 4
    %v737 = vpop.permute.xlu0 %736
    %738 = vrot.lane.b32.xlu0 %v718, 4
    %v739 = vpop.permute.xlu0 %738
    %vm740 = vcmp.lt.s32.totalorder %v42, 4
    %v741 = vsel %vm740, %v725, %v733
    %v742 = vsel %vm740, %v727, %v735
    %v743 = vsel %vm740, %v729, %v737
    %v744 = vsel %vm740, %v731, %v739
    %v745 = vsel %vm740, %v733, %v725
    %v746 = vsel %vm740, %v735, %v727
    %v747 = vsel %vm740, %v737, %v729
    %v748 = vsel %vm740, %v739, %v731
    %v749 = vlaneseq
    %v750 = vshrl.u32 %v749, 7
    %v751 = vsub.s32 0, %v750
    %v752 = vrot.slane %v721, %v751
    %v753 = vmul.f32 %v745, %v752
    %v754 = vmul.f32 %v741, %v752
    %v755 = vmul.f32 %v746, %v752
    %v756 = vmul.f32 %v742, %v752
    %v757 = vmul.f32 %v747, %v752
    %v758 = vmul.f32 %v743, %v752
    %v759 = vmul.f32 %v748, %v752
    %v760 = vmul.f32 %v744, %v752
    %761 = vrot.lane.b32.xlu0 %v702, 124
    %v762 = vpop.permute.xlu0 %761
    %763 = vrot.lane.b32.xlu0 %v706, 124
    %v764 = vpop.permute.xlu0 %763
    %765 = vrot.lane.b32.xlu0 %v712, 124
    %v766 = vpop.permute.xlu0 %765
    %767 = vrot.lane.b32.xlu0 %v716, 124
    %v768 = vpop.permute.xlu0 %767
    %769 = vrot.lane.b32.xlu0 %v704, 124
    %v770 = vpop.permute.xlu0 %769
    %771 = vrot.lane.b32.xlu0 %v708, 124
    %v772 = vpop.permute.xlu0 %771
    %773 = vrot.lane.b32.xlu0 %v714, 124
    %v774 = vpop.permute.xlu0 %773
    %775 = vrot.lane.b32.xlu0 %v718, 124
    %v776 = vpop.permute.xlu0 %775
    %v777 = vsel %vm722, %v762, %v770
    %v778 = vsel %vm722, %v764, %v772
    %v779 = vsel %vm722, %v766, %v774
    %v780 = vsel %vm722, %v768, %v776
    %v781 = vsel %vm722, %v770, %v762
    %v782 = vsel %vm722, %v772, %v764
    %v783 = vsel %vm722, %v774, %v766
    %v784 = vsel %vm722, %v776, %v768
    %v785 = vlaneseq
    %v786 = vshrl.u32 %v785, 7
    %v787 = vsub.s32 0, %v786
    %v788 = vrot.slane %v723, %v787
    %v789 = vmul.f32 %v777, %v788
    %v790 = vmul.f32 %v781, %v788
    %v791 = vmul.f32 %v778, %v788
    %v792 = vmul.f32 %v782, %v788
    %v793 = vmul.f32 %v779, %v788
    %v794 = vmul.f32 %v783, %v788
    %v795 = vmul.f32 %v780, %v788
    %v796 = vmul.f32 %v784, %v788
    %v797 = vpack.c.bf16 %v755, %v753
    %v798 = vpack.c.bf16 %v756, %v754
    %v799 = vpack.c.bf16 %v759, %v757
    %v800 = vpack.c.bf16 %v760, %v758
    %801 = vst [vmem:[#allocation2] sm:$0xff] %v797
    %802 = vst [vmem:[#allocation2 + $0x8] sm:$0xff] %v798
    %803 = vst [vmem:[#allocation2 + $0x10] sm:$0xff] %v799
    %804 = vst [vmem:[#allocation2 + $0x18] sm:$0xff] %v800
    %v805 = vpack.c.bf16 %v706, %v702
    %v806 = vpack.c.bf16 %v708, %v704
    %v807 = vpack.c.bf16 %v716, %v712
    %v808 = vpack.c.bf16 %v718, %v714
    %809 = vst [vmem:[#allocation2 + $0x20] sm:$0xff] %v805
    %810 = vst [vmem:[#allocation2 + $0x28] sm:$0xff] %v806
    %811 = vst [vmem:[#allocation2 + $0x30] sm:$0xff] %v807
    %812 = vst [vmem:[#allocation2 + $0x38] sm:$0xff] %v808
    %v813 = vpack.c.bf16 %v791, %v789
    %v814 = vpack.c.bf16 %v792, %v790
    %v815 = vpack.c.bf16 %v795, %v793
    %v816 = vpack.c.bf16 %v796, %v794
    %817 = vst [vmem:[#allocation2 + $0x40] sm:$0xff] %v813
    %818 = vst [vmem:[#allocation2 + $0x48] sm:$0xff] %v814
    %819 = vst [vmem:[#allocation2 + $0x50] sm:$0xff] %v815
    %820 = vst [vmem:[#allocation2 + $0x58] sm:$0xff] %v816
    %s821 = scalar_lea.vmem %s3, 16
    %v822 = vld [vmem:[%s821] sm:$0xf]
    %v823 = vld [vmem:[%s821 + $0x4] sm:$0xf]
    %v824 = vld [vmem:[#allocation2] sm:$0xff]
    %v825 = vld [vmem:[#allocation2 + $0x8] sm:$0xff]
    %v826 = vld [vmem:[#allocation2 + $0x10] sm:$0xff]
    %v827 = vld [vmem:[#allocation2 + $0x18] sm:$0xff]
    %v828 = vld [vmem:[#allocation2 + $0x20] sm:$0xff]
    %v829 = vld [vmem:[#allocation2 + $0x28] sm:$0xff]
    %v830 = vld [vmem:[#allocation2 + $0x30] sm:$0xff]
    %v831 = vld [vmem:[#allocation2 + $0x38] sm:$0xff]
    %v832 = vld [vmem:[#allocation2 + $0x40] sm:$0xff]
    %v833 = vld [vmem:[#allocation2 + $0x48] sm:$0xff]
    %v834 = vld [vmem:[#allocation2 + $0x50] sm:$0xff]
    %v835 = vld [vmem:[#allocation2 + $0x58] sm:$0xff]
    %v838 = vunpack.c.l.b16 %v822
    %v839 = vunpack.c.l.b16 %v823
    %v840 = vpack.c.b16 %v839, %v838
    %v842 = vsel %vm263, %v840, 0
    %844 = vmatprep.subr.bf16.mxu0 %v825
    %845 = vmatpush1.bf16.msra.mxu0 %v824
    %846 = vmatprep.subr.bf16.mxu0 %v827
    %847 = vmatpush1.bf16.msra.mxu0 %v826
    %848 = vmatprep.subr.bf16.mxu0 %v829
    %849 = vmatpush1.bf16.msra.mxu0 %v828
    %850 = vmatprep.subr.bf16.mxu0 %v831
    %851 = vmatpush1.bf16.msra.mxu0 %v830
    %852 = vmatprep.subr.bf16.mxu0 %v833
    %853 = vmatpush1.bf16.msra.mxu0 %v832
    %854 = vmatprep.subr.bf16.mxu0 %v835
    %855 = vmatpush1.bf16.msra.mxu0 %v834
    %856 = vmatprep.subr.bf16.mxu0 0
    %857 = vmatpush1.bf16.msra.mxu0 0
    %858 = vmatprep.subr.bf16.mxu0 0
    %859 = vmatpush1.bf16.msra.mxu0 0
    %860 = vmatprep.subr.bf16.mxu0 0
    %861 = vmatpush1.bf16.msra.mxu0 0
    %862 = vmatprep.subr.bf16.mxu0 0
    %863 = vmatpush1.bf16.msra.mxu0 0
    %864 = vmatprep.subr.bf16.mxu0 0
    %865 = vmatpush1.bf16.msra.mxu0 0
    %866 = vmatprep.subr.bf16.mxu0 0
    %867 = vmatpush1.bf16.msra.mxu0 0
    %868 = vmatprep.subr.bf16.mxu0 0
    %869 = vmatpush1.bf16.msra.mxu0 0
    %870 = vmatprep.subr.bf16.mxu0 0
    %871 = vmatpush1.bf16.msra.mxu0 0
    %872 = vmatprep.subr.bf16.mxu0 0
    %873 = vmatpush1.bf16.msra.mxu0 0
    %874 = vmatprep.subr.bf16.mxu0 0
    %875 = vmatpush1.bf16.msra.mxu0 0
    %876 = vmatprep.mubr.bf16.mxu0 0
    %877 = vmatmul.mubr.bf16.gmra.mrb[0].mxu0 %v842
    %v878 = vpop.f32.mrb[0].mxu0
    %v879 = vadd.f32 0.0, %v878
    %v880 = vpop.f32.mrb[0].mxu0
    %v881 = vadd.f32 0.0, %v880
    %v882 = vpop.f32.mrb[0].mxu0
    %v883 = vadd.f32 0.0, %v882
    %v884 = vpop.f32.mrb[0].mxu0
    %v885 = vadd.f32 0.0, %v884
    %886 = vdwg.mxu0
    %v887 = vadd.f32 %v615, %v879
    %v888 = vadd.f32 %v616, %v881
    %v889 = vadd.f32 %v617, %v883
    %v890 = vadd.f32 %v618, %v885
    %s891 = scalar_lea.vmem %s4, 32
    %v892 = vld [vmem:[%s891] sm:$0xff]
    %v893 = vld [vmem:[%s891 + $0x8] sm:$0xff]
    %895 = vset.pattern.permute.xlu0 0
    %896 = vperm.xlu0 %895, %v892
    %v897 = vpop.permute.xlu0 %896
    %900 = vset.pattern.permute.xlu0 0
    %901 = vperm.xlu0 %900, %v893
    %v902 = vpop.permute.xlu0 %901
    %v904 = vadd.f32 %v887, %v897
    %v905 = vadd.f32 %v888, %v897
    %v906 = vadd.f32 %v889, %v902
    %v907 = vadd.f32 %v890, %v902
    %s908 = scalar_lea.vmem %s1, 48
    %v909 = vld [vmem:[%s908] sm:$0xf]
    %v910 = vld [vmem:[%s908 + $0x4] sm:$0xf]
    %v911 = vld [vmem:[%s908 + $0x8] sm:$0xf]
    %v912 = vld [vmem:[%s908 + $0xc] sm:$0xf]
    %v913 = vpack.c.bf16 %v906, %v904
    %v914 = vpack.c.bf16 %v907, %v905
    %s915 = scalar_lea.vmem %s2, 96
    %v916 = vld [vmem:[%s915] sm:$0xff]
    %v917 = vld [vmem:[%s915 + $0x8] sm:$0xff]
    %v918 = vld [vmem:[%s915 + $0x10] sm:$0xff]
    %v919 = vld [vmem:[%s915 + $0x18] sm:$0xff]
    %921 = vset.pattern.permute.xlu0 0
    %922 = vperm.xlu0 %921, %v916
    %v923 = vpop.permute.xlu0 %922
    %926 = vset.pattern.permute.xlu0 0
    %927 = vperm.xlu0 %926, %v917
    %v928 = vpop.permute.xlu0 %927
    %931 = vset.pattern.permute.xlu0 0
    %932 = vperm.xlu0 %931, %v918
    %v933 = vpop.permute.xlu0 %932
    %936 = vset.pattern.permute.xlu0 0
    %937 = vperm.xlu0 %936, %v919
    %v938 = vpop.permute.xlu0 %937
    %v944 = vunpack.c.l.b16 %v909
    %v945 = vunpack.c.l.b16 %v910
    %v946 = vunpack.c.l.b16 %v911
    %v947 = vunpack.c.l.b16 %v912
    %v948 = vpack.c.b16 %v945, %v944
    %v949 = vpack.c.b16 %v947, %v946
    %v951 = vsel %vm83, %v948, 0
    %v954 = vsel %vm83, %v949, 0
    %956 = vmatprep.subr.bf16.mxu0 %v914
    %957 = vmatpush1.bf16.msra.mxu0 %v913
    %958 = vmatprep.subr.bf16.mxu0 0
    %959 = vmatpush1.bf16.msra.mxu0 0
    %960 = vmatprep.subr.bf16.mxu0 0
    %961 = vmatpush1.bf16.msra.mxu0 0
    %962 = vmatprep.subr.bf16.mxu0 0
    %963 = vmatpush1.bf16.msra.mxu0 0
    %964 = vmatprep.subr.bf16.mxu0 0
    %965 = vmatpush1.bf16.msra.mxu0 0
    %966 = vmatprep.subr.bf16.mxu0 0
    %967 = vmatpush1.bf16.msra.mxu0 0
    %968 = vmatprep.subr.bf16.mxu0 0
    %969 = vmatpush1.bf16.msra.mxu0 0
    %970 = vmatprep.subr.bf16.mxu0 0
    %971 = vmatpush1.bf16.msra.mxu0 0
    %972 = vmatprep.subr.bf16.mxu0 0
    %973 = vmatpush1.bf16.msra.mxu0 0
    %974 = vmatprep.subr.bf16.mxu0 0
    %975 = vmatpush1.bf16.msra.mxu0 0
    %976 = vmatprep.subr.bf16.mxu0 0
    %977 = vmatpush1.bf16.msra.mxu0 0
    %978 = vmatprep.subr.bf16.mxu0 0
    %979 = vmatpush1.bf16.msra.mxu0 0
    %980 = vmatprep.subr.bf16.mxu0 0
    %981 = vmatpush1.bf16.msra.mxu0 0
    %982 = vmatprep.subr.bf16.mxu0 0
    %983 = vmatpush1.bf16.msra.mxu0 0
    %984 = vmatprep.subr.bf16.mxu0 0
    %985 = vmatpush1.bf16.msra.mxu0 0
    %986 = vmatprep.subr.bf16.mxu0 0
    %987 = vmatpush1.bf16.msra.mxu0 0
    %988 = vmatprep.mubr.bf16.mxu0 0
    %989 = vmatmul.mubr.bf16.gmra.mrb[0].mxu0 %v951
    %v990 = vpop.f32.mrb[0].mxu0
    %v991 = vadd.f32 %v923, %v990
    %v992 = vpop.f32.mrb[0].mxu0
    %v993 = vadd.f32 %v923, %v992
    %v994 = vpop.f32.mrb[0].mxu0
    %v995 = vadd.f32 %v928, %v994
    %v996 = vpop.f32.mrb[0].mxu0
    %v997 = vadd.f32 %v928, %v996
    %998 = vmatprep.mubr.bf16.mxu0 0
    %999 = vmatmul.mubr.bf16.gmra.mrb[0].mxu0 %v954
    %v1000 = vpop.f32.mrb[0].mxu0
    %v1001 = vadd.f32 %v933, %v1000
    %v1002 = vpop.f32.mrb[0].mxu0
    %v1003 = vadd.f32 %v933, %v1002
    %v1004 = vpop.f32.mrb[0].mxu0
    %v1005 = vadd.f32 %v938, %v1004
    %v1006 = vpop.f32.mrb[0].mxu0
    %v1007 = vadd.f32 %v938, %v1006
    %1008 = vdwg.mxu0
    %vm1009 = vcmp.ge.s32.totalorder %v42, 8
    %v1010 = vsel %vm1009, 1.0, 0.0
    %vm1011 = vcmp.lt.s32.totalorder %v42, 120
    %v1012 = vsel %vm1011, 1.0, 0.0
    %1013 = vrot.lane.b32.xlu0 %v991, 8
    %v1014 = vpop.permute.xlu0 %1013
    %1015 = vrot.lane.b32.xlu0 %v995, 8
    %v1016 = vpop.permute.xlu0 %1015
    %1017 = vrot.lane.b32.xlu0 %v1001, 8
    %v1018 = vpop.permute.xlu0 %1017
    %1019 = vrot.lane.b32.xlu0 %v1005, 8
    %v1020 = vpop.permute.xlu0 %1019
    %1021 = vrot.lane.b32.xlu0 %v993, 8
    %v1022 = vpop.permute.xlu0 %1021
    %1023 = vrot.lane.b32.xlu0 %v997, 8
    %v1024 = vpop.permute.xlu0 %1023
    %1025 = vrot.lane.b32.xlu0 %v1003, 8
    %v1026 = vpop.permute.xlu0 %1025
    %1027 = vrot.lane.b32.xlu0 %v1007, 8
    %v1028 = vpop.permute.xlu0 %1027
    %vm1029 = vcmp.lt.s32.totalorder %v42, 8
    %v1030 = vsel %vm1029, %v1014, %v1022
    %v1031 = vsel %vm1029, %v1016, %v1024
    %v1032 = vsel %vm1029, %v1018, %v1026
    %v1033 = vsel %vm1029, %v1020, %v1028
    %v1034 = vsel %vm1029, %v1022, %v1014
    %v1035 = vsel %vm1029, %v1024, %v1016
    %v1036 = vsel %vm1029, %v1026, %v1018
    %v1037 = vsel %vm1029, %v1028, %v1020
    %v1038 = vlaneseq
    %v1039 = vshrl.u32 %v1038, 7
    %v1040 = vsub.s32 0, %v1039
    %v1041 = vrot.slane %v1010, %v1040
    %v1042 = vmul.f32 %v1034, %v1041
    %v1043 = vmul.f32 %v1030, %v1041
    %v1044 = vmul.f32 %v1035, %v1041
    %v1045 = vmul.f32 %v1031, %v1041
    %v1046 = vmul.f32 %v1036, %v1041
    %v1047 = vmul.f32 %v1032, %v1041
    %v1048 = vmul.f32 %v1037, %v1041
    %v1049 = vmul.f32 %v1033, %v1041
    %1050 = vrot.lane.b32.xlu0 %v991, 120
    %v1051 = vpop.permute.xlu0 %1050
    %1052 = vrot.lane.b32.xlu0 %v995, 120
    %v1053 = vpop.permute.xlu0 %1052
    %1054 = vrot.lane.b32.xlu0 %v1001, 120
    %v1055 = vpop.permute.xlu0 %1054
    %1056 = vrot.lane.b32.xlu0 %v1005, 120
    %v1057 = vpop.permute.xlu0 %1056
    %1058 = vrot.lane.b32.xlu0 %v993, 120
    %v1059 = vpop.permute.xlu0 %1058
    %1060 = vrot.lane.b32.xlu0 %v997, 120
    %v1061 = vpop.permute.xlu0 %1060
    %1062 = vrot.lane.b32.xlu0 %v1003, 120
    %v1063 = vpop.permute.xlu0 %1062
    %1064 = vrot.lane.b32.xlu0 %v1007, 120
    %v1065 = vpop.permute.xlu0 %1064
    %v1066 = vsel %vm1011, %v1051, %v1059
    %v1067 = vsel %vm1011, %v1053, %v1061
    %v1068 = vsel %vm1011, %v1055, %v1063
    %v1069 = vsel %vm1011, %v1057, %v1065
    %v1070 = vsel %vm1011, %v1059, %v1051
    %v1071 = vsel %vm1011, %v1061, %v1053
    %v1072 = vsel %vm1011, %v1063, %v1055
    %v1073 = vsel %vm1011, %v1065, %v1057
    %v1074 = vlaneseq
    %v1075 = vshrl.u32 %v1074, 7
    %v1076 = vsub.s32 0, %v1075
    %v1077 = vrot.slane %v1012, %v1076
    %v1078 = vmul.f32 %v1066, %v1077
    %v1079 = vmul.f32 %v1070, %v1077
    %v1080 = vmul.f32 %v1067, %v1077
    %v1081 = vmul.f32 %v1071, %v1077
    %v1082 = vmul.f32 %v1068, %v1077
    %v1083 = vmul.f32 %v1072, %v1077
    %v1084 = vmul.f32 %v1069, %v1077
    %v1085 = vmul.f32 %v1073, %v1077
    %v1086 = vpack.c.bf16 %v1044, %v1042
    %v1087 = vpack.c.bf16 %v1045, %v1043
    %v1088 = vpack.c.bf16 %v1048, %v1046
    %v1089 = vpack.c.bf16 %v1049, %v1047
    %1090 = vst [vmem:[#allocation2] sm:$0xff] %v1086
    %1091 = vst [vmem:[#allocation2 + $0x8] sm:$0xff] %v1087
    %1092 = vst [vmem:[#allocation2 + $0x10] sm:$0xff] %v1088
    %1093 = vst [vmem:[#allocation2 + $0x18] sm:$0xff] %v1089
    %v1094 = vpack.c.bf16 %v995, %v991
    %v1095 = vpack.c.bf16 %v997, %v993
    %v1096 = vpack.c.bf16 %v1005, %v1001
    %v1097 = vpack.c.bf16 %v1007, %v1003
    %1098 = vst [vmem:[#allocation2 + $0x20] sm:$0xff] %v1094
    %1099 = vst [vmem:[#allocation2 + $0x28] sm:$0xff] %v1095
    %1100 = vst [vmem:[#allocation2 + $0x30] sm:$0xff] %v1096
    %1101 = vst [vmem:[#allocation2 + $0x38] sm:$0xff] %v1097
    %v1102 = vpack.c.bf16 %v1080, %v1078
    %v1103 = vpack.c.bf16 %v1081, %v1079
    %v1104 = vpack.c.bf16 %v1084, %v1082
    %v1105 = vpack.c.bf16 %v1085, %v1083
    %1106 = vst [vmem:[#allocation2 + $0x40] sm:$0xff] %v1102
    %1107 = vst [vmem:[#allocation2 + $0x48] sm:$0xff] %v1103
    %1108 = vst [vmem:[#allocation2 + $0x50] sm:$0xff] %v1104
    %1109 = vst [vmem:[#allocation2 + $0x58] sm:$0xff] %v1105
    %s1110 = scalar_lea.vmem %s3, 24
    %v1111 = vld [vmem:[%s1110] sm:$0xf]
    %v1112 = vld [vmem:[%s1110 + $0x4] sm:$0xf]
    %v1113 = vld [vmem:[#allocation2] sm:$0xff]
    %v1114 = vld [vmem:[#allocation2 + $0x8] sm:$0xff]
    %v1115 = vld [vmem:[#allocation2 + $0x10] sm:$0xff]
    %v1116 = vld [vmem:[#allocation2 + $0x18] sm:$0xff]
    %v1117 = vld [vmem:[#allocation2 + $0x20] sm:$0xff]
    %v1118 = vld [vmem:[#allocation2 + $0x28] sm:$0xff]
    %v1119 = vld [vmem:[#allocation2 + $0x30] sm:$0xff]
    %v1120 = vld [vmem:[#allocation2 + $0x38] sm:$0xff]
    %v1121 = vld [vmem:[#allocation2 + $0x40] sm:$0xff]
    %v1122 = vld [vmem:[#allocation2 + $0x48] sm:$0xff]
    %v1123 = vld [vmem:[#allocation2 + $0x50] sm:$0xff]
    %v1124 = vld [vmem:[#allocation2 + $0x58] sm:$0xff]
    %v1127 = vunpack.c.l.b16 %v1111
    %v1128 = vunpack.c.l.b16 %v1112
    %v1129 = vpack.c.b16 %v1128, %v1127
    %v1131 = vsel %vm263, %v1129, 0
    %1133 = vmatprep.subr.bf16.mxu0 %v1114
    %1134 = vmatpush1.bf16.msra.mxu0 %v1113
    %1135 = vmatprep.subr.bf16.mxu0 %v1116
    %1136 = vmatpush1.bf16.msra.mxu0 %v1115
    %1137 = vmatprep.subr.bf16.mxu0 %v1118
    %1138 = vmatpush1.bf16.msra.mxu0 %v1117
    %1139 = vmatprep.subr.bf16.mxu0 %v1120
    %1140 = vmatpush1.bf16.msra.mxu0 %v1119
    %1141 = vmatprep.subr.bf16.mxu0 %v1122
    %1142 = vmatpush1.bf16.msra.mxu0 %v1121
    %1143 = vmatprep.subr.bf16.mxu0 %v1124
    %1144 = vmatpush1.bf16.msra.mxu0 %v1123
    %1145 = vmatprep.subr.bf16.mxu0 0
    %1146 = vmatpush1.bf16.msra.mxu0 0
    %1147 = vmatprep.subr.bf16.mxu0 0
    %1148 = vmatpush1.bf16.msra.mxu0 0
    %1149 = vmatprep.subr.bf16.mxu0 0
    %1150 = vmatpush1.bf16.msra.mxu0 0
    %1151 = vmatprep.subr.bf16.mxu0 0
    %1152 = vmatpush1.bf16.msra.mxu0 0
    %1153 = vmatprep.subr.bf16.mxu0 0
    %1154 = vmatpush1.bf16.msra.mxu0 0
    %1155 = vmatprep.subr.bf16.mxu0 0
    %1156 = vmatpush1.bf16.msra.mxu0 0
    %1157 = vmatprep.subr.bf16.mxu0 0
    %1158 = vmatpush1.bf16.msra.mxu0 0
    %1159 = vmatprep.subr.bf16.mxu0 0
    %1160 = vmatpush1.bf16.msra.mxu0 0
    %1161 = vmatprep.subr.bf16.mxu0 0
    %1162 = vmatpush1.bf16.msra.mxu0 0
    %1163 = vmatprep.subr.bf16.mxu0 0
    %1164 = vmatpush1.bf16.msra.mxu0 0
    %1165 = vmatprep.mubr.bf16.mxu0 0
    %1166 = vmatmul.mubr.bf16.gmra.mrb[0].mxu0 %v1131
    %v1167 = vpop.f32.mrb[0].mxu0
    %v1168 = vadd.f32 0.0, %v1167
    %v1169 = vpop.f32.mrb[0].mxu0
    %v1170 = vadd.f32 0.0, %v1169
    %v1171 = vpop.f32.mrb[0].mxu0
    %v1172 = vadd.f32 0.0, %v1171
    %v1173 = vpop.f32.mrb[0].mxu0
    %v1174 = vadd.f32 0.0, %v1173
    %1175 = vdwg.mxu0
    %v1176 = vadd.f32 %v904, %v1168
    %v1177 = vadd.f32 %v905, %v1170
    %v1178 = vadd.f32 %v906, %v1172
    %v1179 = vadd.f32 %v907, %v1174
    %s1180 = scalar_lea.vmem %s4, 48
    %v1181 = vld [vmem:[%s1180] sm:$0xff]
    %v1182 = vld [vmem:[%s1180 + $0x8] sm:$0xff]
    %1184 = vset.pattern.permute.xlu0 0
    %1185 = vperm.xlu0 %1184, %v1181
    %v1186 = vpop.permute.xlu0 %1185
    %1189 = vset.pattern.permute.xlu0 0
    %1190 = vperm.xlu0 %1189, %v1182
    %v1191 = vpop.permute.xlu0 %1190
    %v1193 = vadd.f32 %v1176, %v1186
    %v1194 = vadd.f32 %v1177, %v1186
    %v1195 = vadd.f32 %v1178, %v1191
    %v1196 = vadd.f32 %v1179, %v1191
    %s1197 = scalar_lea.vmem %s1, 64
    %v1198 = vld [vmem:[%s1197] sm:$0xf]
    %v1199 = vld [vmem:[%s1197 + $0x4] sm:$0xf]
    %v1200 = vld [vmem:[%s1197 + $0x8] sm:$0xf]
    %v1201 = vld [vmem:[%s1197 + $0xc] sm:$0xf]
    %v1202 = vpack.c.bf16 %v1195, %v1193
    %v1203 = vpack.c.bf16 %v1196, %v1194
    %s1204 = scalar_lea.vmem %s2, 128
    %v1205 = vld [vmem:[%s1204] sm:$0xff]
    %v1206 = vld [vmem:[%s1204 + $0x8] sm:$0xff]
    %v1207 = vld [vmem:[%s1204 + $0x10] sm:$0xff]
    %v1208 = vld [vmem:[%s1204 + $0x18] sm:$0xff]
    %1210 = vset.pattern.permute.xlu0 0
    %1211 = vperm.xlu0 %1210, %v1205
    %v1212 = vpop.permute.xlu0 %1211
    %1215 = vset.pattern.permute.xlu0 0
    %1216 = vperm.xlu0 %1215, %v1206
    %v1217 = vpop.permute.xlu0 %1216
    %1220 = vset.pattern.permute.xlu0 0
    %1221 = vperm.xlu0 %1220, %v1207
    %v1222 = vpop.permute.xlu0 %1221
    %1225 = vset.pattern.permute.xlu0 0
    %1226 = vperm.xlu0 %1225, %v1208
    %v1227 = vpop.permute.xlu0 %1226
    %v1233 = vunpack.c.l.b16 %v1198
    %v1234 = vunpack.c.l.b16 %v1199
    %v1235 = vunpack.c.l.b16 %v1200
    %v1236 = vunpack.c.l.b16 %v1201
    %v1237 = vpack.c.b16 %v1234, %v1233
    %v1238 = vpack.c.b16 %v1236, %v1235
    %v1240 = vsel %vm83, %v1237, 0
    %v1243 = vsel %vm83, %v1238, 0
    %1245 = vmatprep.subr.bf16.mxu0 %v1203
    %1246 = vmatpush1.bf16.msra.mxu0 %v1202
    %1247 = vmatprep.subr.bf16.mxu0 0
    %1248 = vmatpush1.bf16.msra.mxu0 0
    %1249 = vmatprep.subr.bf16.mxu0 0
    %1250 = vmatpush1.bf16.msra.mxu0 0
    %1251 = vmatprep.subr.bf16.mxu0 0
    %1252 = vmatpush1.bf16.msra.mxu0 0
    %1253 = vmatprep.subr.bf16.mxu0 0
    %1254 = vmatpush1.bf16.msra.mxu0 0
    %1255 = vmatprep.subr.bf16.mxu0 0
    %1256 = vmatpush1.bf16.msra.mxu0 0
    %1257 = vmatprep.subr.bf16.mxu0 0
    %1258 = vmatpush1.bf16.msra.mxu0 0
    %1259 = vmatprep.subr.bf16.mxu0 0
    %1260 = vmatpush1.bf16.msra.mxu0 0
    %1261 = vmatprep.subr.bf16.mxu0 0
    %1262 = vmatpush1.bf16.msra.mxu0 0
    %1263 = vmatprep.subr.bf16.mxu0 0
    %1264 = vmatpush1.bf16.msra.mxu0 0
    %1265 = vmatprep.subr.bf16.mxu0 0
    %1266 = vmatpush1.bf16.msra.mxu0 0
    %1267 = vmatprep.subr.bf16.mxu0 0
    %1268 = vmatpush1.bf16.msra.mxu0 0
    %1269 = vmatprep.subr.bf16.mxu0 0
    %1270 = vmatpush1.bf16.msra.mxu0 0
    %1271 = vmatprep.subr.bf16.mxu0 0
    %1272 = vmatpush1.bf16.msra.mxu0 0
    %1273 = vmatprep.subr.bf16.mxu0 0
    %1274 = vmatpush1.bf16.msra.mxu0 0
    %1275 = vmatprep.subr.bf16.mxu0 0
    %1276 = vmatpush1.bf16.msra.mxu0 0
    %1277 = vmatprep.mubr.bf16.mxu0 0
    %1278 = vmatmul.mubr.bf16.gmra.mrb[0].mxu0 %v1240
    %v1279 = vpop.f32.mrb[0].mxu0
    %v1280 = vadd.f32 %v1212, %v1279
    %v1281 = vpop.f32.mrb[0].mxu0
    %v1282 = vadd.f32 %v1212, %v1281
    %v1283 = vpop.f32.mrb[0].mxu0
    %v1284 = vadd.f32 %v1217, %v1283
    %v1285 = vpop.f32.mrb[0].mxu0
    %v1286 = vadd.f32 %v1217, %v1285
    %1287 = vmatprep.mubr.bf16.mxu0 0
    %1288 = vmatmul.mubr.bf16.gmra.mrb[0].mxu0 %v1243
    %v1289 = vpop.f32.mrb[0].mxu0
    %v1290 = vadd.f32 %v1222, %v1289
    %v1291 = vpop.f32.mrb[0].mxu0
    %v1292 = vadd.f32 %v1222, %v1291
    %v1293 = vpop.f32.mrb[0].mxu0
    %v1294 = vadd.f32 %v1227, %v1293
    %v1295 = vpop.f32.mrb[0].mxu0
    %v1296 = vadd.f32 %v1227, %v1295
    %1297 = vdwg.mxu0
    %vm1298 = vcmp.ge.s32.totalorder %v42, 16
    %v1299 = vsel %vm1298, 1.0, 0.0
    %vm1300 = vcmp.lt.s32.totalorder %v42, 112
    %v1301 = vsel %vm1300, 1.0, 0.0
    %1302 = vrot.lane.b32.xlu0 %v1280, 16
    %v1303 = vpop.permute.xlu0 %1302
    %1304 = vrot.lane.b32.xlu0 %v1284, 16
    %v1305 = vpop.permute.xlu0 %1304
    %1306 = vrot.lane.b32.xlu0 %v1290, 16
    %v1307 = vpop.permute.xlu0 %1306
    %1308 = vrot.lane.b32.xlu0 %v1294, 16
    %v1309 = vpop.permute.xlu0 %1308
    %1310 = vrot.lane.b32.xlu0 %v1282, 16
    %v1311 = vpop.permute.xlu0 %1310
    %1312 = vrot.lane.b32.xlu0 %v1286, 16
    %v1313 = vpop.permute.xlu0 %1312
    %1314 = vrot.lane.b32.xlu0 %v1292, 16
    %v1315 = vpop.permute.xlu0 %1314
    %1316 = vrot.lane.b32.xlu0 %v1296, 16
    %v1317 = vpop.permute.xlu0 %1316
    %vm1318 = vcmp.lt.s32.totalorder %v42, 16
    %v1319 = vsel %vm1318, %v1303, %v1311
    %v1320 = vsel %vm1318, %v1305, %v1313
    %v1321 = vsel %vm1318, %v1307, %v1315
    %v1322 = vsel %vm1318, %v1309, %v1317
    %v1323 = vsel %vm1318, %v1311, %v1303
    %v1324 = vsel %vm1318, %v1313, %v1305
    %v1325 = vsel %vm1318, %v1315, %v1307
    %v1326 = vsel %vm1318, %v1317, %v1309
    %v1327 = vlaneseq
    %v1328 = vshrl.u32 %v1327, 7
    %v1329 = vsub.s32 0, %v1328
    %v1330 = vrot.slane %v1299, %v1329
    %v1331 = vmul.f32 %v1323, %v1330
    %v1332 = vmul.f32 %v1319, %v1330
    %v1333 = vmul.f32 %v1324, %v1330
    %v1334 = vmul.f32 %v1320, %v1330
    %v1335 = vmul.f32 %v1325, %v1330
    %v1336 = vmul.f32 %v1321, %v1330
    %v1337 = vmul.f32 %v1326, %v1330
    %v1338 = vmul.f32 %v1322, %v1330
    %1339 = vrot.lane.b32.xlu0 %v1280, 112
    %v1340 = vpop.permute.xlu0 %1339
    %1341 = vrot.lane.b32.xlu0 %v1284, 112
    %v1342 = vpop.permute.xlu0 %1341
    %1343 = vrot.lane.b32.xlu0 %v1290, 112
    %v1344 = vpop.permute.xlu0 %1343
    %1345 = vrot.lane.b32.xlu0 %v1294, 112
    %v1346 = vpop.permute.xlu0 %1345
    %1347 = vrot.lane.b32.xlu0 %v1282, 112
    %v1348 = vpop.permute.xlu0 %1347
    %1349 = vrot.lane.b32.xlu0 %v1286, 112
    %v1350 = vpop.permute.xlu0 %1349
    %1351 = vrot.lane.b32.xlu0 %v1292, 112
    %v1352 = vpop.permute.xlu0 %1351
    %1353 = vrot.lane.b32.xlu0 %v1296, 112
    %v1354 = vpop.permute.xlu0 %1353
    %v1355 = vsel %vm1300, %v1340, %v1348
    %v1356 = vsel %vm1300, %v1342, %v1350
    %v1357 = vsel %vm1300, %v1344, %v1352
    %v1358 = vsel %vm1300, %v1346, %v1354
    %v1359 = vsel %vm1300, %v1348, %v1340
    %v1360 = vsel %vm1300, %v1350, %v1342
    %v1361 = vsel %vm1300, %v1352, %v1344
    %v1362 = vsel %vm1300, %v1354, %v1346
    %v1363 = vlaneseq
    %v1364 = vshrl.u32 %v1363, 7
    %v1365 = vsub.s32 0, %v1364
    %v1366 = vrot.slane %v1301, %v1365
    %v1367 = vmul.f32 %v1355, %v1366
    %v1368 = vmul.f32 %v1359, %v1366
    %v1369 = vmul.f32 %v1356, %v1366
    %v1370 = vmul.f32 %v1360, %v1366
    %v1371 = vmul.f32 %v1357, %v1366
    %v1372 = vmul.f32 %v1361, %v1366
    %v1373 = vmul.f32 %v1358, %v1366
    %v1374 = vmul.f32 %v1362, %v1366
    %v1375 = vpack.c.bf16 %v1333, %v1331
    %v1376 = vpack.c.bf16 %v1334, %v1332
    %v1377 = vpack.c.bf16 %v1337, %v1335
    %v1378 = vpack.c.bf16 %v1338, %v1336
    %1379 = vst [vmem:[#allocation2] sm:$0xff] %v1375
    %1380 = vst [vmem:[#allocation2 + $0x8] sm:$0xff] %v1376
    %1381 = vst [vmem:[#allocation2 + $0x10] sm:$0xff] %v1377
    %1382 = vst [vmem:[#allocation2 + $0x18] sm:$0xff] %v1378
    %v1383 = vpack.c.bf16 %v1284, %v1280
    %v1384 = vpack.c.bf16 %v1286, %v1282
    %v1385 = vpack.c.bf16 %v1294, %v1290
    %v1386 = vpack.c.bf16 %v1296, %v1292
    %1387 = vst [vmem:[#allocation2 + $0x20] sm:$0xff] %v1383
    %1388 = vst [vmem:[#allocation2 + $0x28] sm:$0xff] %v1384
    %1389 = vst [vmem:[#allocation2 + $0x30] sm:$0xff] %v1385
    %1390 = vst [vmem:[#allocation2 + $0x38] sm:$0xff] %v1386
    %v1391 = vpack.c.bf16 %v1369, %v1367
    %v1392 = vpack.c.bf16 %v1370, %v1368
    %v1393 = vpack.c.bf16 %v1373, %v1371
    %v1394 = vpack.c.bf16 %v1374, %v1372
    %1395 = vst [vmem:[#allocation2 + $0x40] sm:$0xff] %v1391
    %1396 = vst [vmem:[#allocation2 + $0x48] sm:$0xff] %v1392
    %1397 = vst [vmem:[#allocation2 + $0x50] sm:$0xff] %v1393
    %1398 = vst [vmem:[#allocation2 + $0x58] sm:$0xff] %v1394
    %s1399 = scalar_lea.vmem %s3, 32
    %v1400 = vld [vmem:[%s1399] sm:$0xf]
    %v1401 = vld [vmem:[%s1399 + $0x4] sm:$0xf]
    %v1402 = vld [vmem:[#allocation2] sm:$0xff]
    %v1403 = vld [vmem:[#allocation2 + $0x8] sm:$0xff]
    %v1404 = vld [vmem:[#allocation2 + $0x10] sm:$0xff]
    %v1405 = vld [vmem:[#allocation2 + $0x18] sm:$0xff]
    %v1406 = vld [vmem:[#allocation2 + $0x20] sm:$0xff]
    %v1407 = vld [vmem:[#allocation2 + $0x28] sm:$0xff]
    %v1408 = vld [vmem:[#allocation2 + $0x30] sm:$0xff]
    %v1409 = vld [vmem:[#allocation2 + $0x38] sm:$0xff]
    %v1410 = vld [vmem:[#allocation2 + $0x40] sm:$0xff]
    %v1411 = vld [vmem:[#allocation2 + $0x48] sm:$0xff]
    %v1412 = vld [vmem:[#allocation2 + $0x50] sm:$0xff]
    %v1413 = vld [vmem:[#allocation2 + $0x58] sm:$0xff]
    %v1416 = vunpack.c.l.b16 %v1400
    %v1417 = vunpack.c.l.b16 %v1401
    %v1418 = vpack.c.b16 %v1417, %v1416
    %v1420 = vsel %vm263, %v1418, 0
    %1422 = vmatprep.subr.bf16.mxu0 %v1403
    %1423 = vmatpush1.bf16.msra.mxu0 %v1402
    %1424 = vmatprep.subr.bf16.mxu0 %v1405
    %1425 = vmatpush1.bf16.msra.mxu0 %v1404
    %1426 = vmatprep.subr.bf16.mxu0 %v1407
    %1427 = vmatpush1.bf16.msra.mxu0 %v1406
    %1428 = vmatprep.subr.bf16.mxu0 %v1409
    %1429 = vmatpush1.bf16.msra.mxu0 %v1408
    %1430 = vmatprep.subr.bf16.mxu0 %v1411
    %1431 = vmatpush1.bf16.msra.mxu0 %v1410
    %1432 = vmatprep.subr.bf16.mxu0 %v1413
    %1433 = vmatpush1.bf16.msra.mxu0 %v1412
    %1434 = vmatprep.subr.bf16.mxu0 0
    %1435 = vmatpush1.bf16.msra.mxu0 0
    %1436 = vmatprep.subr.bf16.mxu0 0
    %1437 = vmatpush1.bf16.msra.mxu0 0
    %1438 = vmatprep.subr.bf16.mxu0 0
    %1439 = vmatpush1.bf16.msra.mxu0 0
    %1440 = vmatprep.subr.bf16.mxu0 0
    %1441 = vmatpush1.bf16.msra.mxu0 0
    %1442 = vmatprep.subr.bf16.mxu0 0
    %1443 = vmatpush1.bf16.msra.mxu0 0
    %1444 = vmatprep.subr.bf16.mxu0 0
    %1445 = vmatpush1.bf16.msra.mxu0 0
    %1446 = vmatprep.subr.bf16.mxu0 0
    %1447 = vmatpush1.bf16.msra.mxu0 0
    %1448 = vmatprep.subr.bf16.mxu0 0
    %1449 = vmatpush1.bf16.msra.mxu0 0
    %1450 = vmatprep.subr.bf16.mxu0 0
    %1451 = vmatpush1.bf16.msra.mxu0 0
    %1452 = vmatprep.subr.bf16.mxu0 0
    %1453 = vmatpush1.bf16.msra.mxu0 0
    %1454 = vmatprep.mubr.bf16.mxu0 0
    %1455 = vmatmul.mubr.bf16.gmra.mrb[0].mxu0 %v1420
    %v1456 = vpop.f32.mrb[0].mxu0
    %v1457 = vadd.f32 0.0, %v1456
    %v1458 = vpop.f32.mrb[0].mxu0
    %v1459 = vadd.f32 0.0, %v1458
    %v1460 = vpop.f32.mrb[0].mxu0
    %v1461 = vadd.f32 0.0, %v1460
    %v1462 = vpop.f32.mrb[0].mxu0
    %v1463 = vadd.f32 0.0, %v1462
    %1464 = vdwg.mxu0
    %v1465 = vadd.f32 %v1193, %v1457
    %v1466 = vadd.f32 %v1194, %v1459
    %v1467 = vadd.f32 %v1195, %v1461
    %v1468 = vadd.f32 %v1196, %v1463
    %s1469 = scalar_lea.vmem %s4, 64
    %v1470 = vld [vmem:[%s1469] sm:$0xff]
    %v1471 = vld [vmem:[%s1469 + $0x8] sm:$0xff]
    %1473 = vset.pattern.permute.xlu0 0
    %1474 = vperm.xlu0 %1473, %v1470
    %v1475 = vpop.permute.xlu0 %1474
    %1478 = vset.pattern.permute.xlu0 0
    %1479 = vperm.xlu0 %1478, %v1471
    %v1480 = vpop.permute.xlu0 %1479
    %v1482 = vadd.f32 %v1465, %v1475
    %v1483 = vadd.f32 %v1466, %v1475
    %v1484 = vadd.f32 %v1467, %v1480
    %v1485 = vadd.f32 %v1468, %v1480
    %s1486 = scalar_lea.vmem %s1, 80
    %v1487 = vld [vmem:[%s1486] sm:$0xf]
    %v1488 = vld [vmem:[%s1486 + $0x4] sm:$0xf]
    %v1489 = vld [vmem:[%s1486 + $0x8] sm:$0xf]
    %v1490 = vld [vmem:[%s1486 + $0xc] sm:$0xf]
    %v1491 = vpack.c.bf16 %v1484, %v1482
    %v1492 = vpack.c.bf16 %v1485, %v1483
    %s1493 = scalar_lea.vmem %s2, 160
    %v1494 = vld [vmem:[%s1493] sm:$0xff]
    %v1495 = vld [vmem:[%s1493 + $0x8] sm:$0xff]
    %v1496 = vld [vmem:[%s1493 + $0x10] sm:$0xff]
    %v1497 = vld [vmem:[%s1493 + $0x18] sm:$0xff]
    %1499 = vset.pattern.permute.xlu0 0
    %1500 = vperm.xlu0 %1499, %v1494
    %v1501 = vpop.permute.xlu0 %1500
    %1504 = vset.pattern.permute.xlu0 0
    %1505 = vperm.xlu0 %1504, %v1495
    %v1506 = vpop.permute.xlu0 %1505
    %1509 = vset.pattern.permute.xlu0 0
    %1510 = vperm.xlu0 %1509, %v1496
    %v1511 = vpop.permute.xlu0 %1510
    %1514 = vset.pattern.permute.xlu0 0
    %1515 = vperm.xlu0 %1514, %v1497
    %v1516 = vpop.permute.xlu0 %1515
    %v1522 = vunpack.c.l.b16 %v1487
    %v1523 = vunpack.c.l.b16 %v1488
    %v1524 = vunpack.c.l.b16 %v1489
    %v1525 = vunpack.c.l.b16 %v1490
    %v1526 = vpack.c.b16 %v1523, %v1522
    %v1527 = vpack.c.b16 %v1525, %v1524
    %v1529 = vsel %vm83, %v1526, 0
    %v1532 = vsel %vm83, %v1527, 0
    %1534 = vmatprep.subr.bf16.mxu0 %v1492
    %1535 = vmatpush1.bf16.msra.mxu0 %v1491
    %1536 = vmatprep.subr.bf16.mxu0 0
    %1537 = vmatpush1.bf16.msra.mxu0 0
    %1538 = vmatprep.subr.bf16.mxu0 0
    %1539 = vmatpush1.bf16.msra.mxu0 0
    %1540 = vmatprep.subr.bf16.mxu0 0
    %1541 = vmatpush1.bf16.msra.mxu0 0
    %1542 = vmatprep.subr.bf16.mxu0 0
    %1543 = vmatpush1.bf16.msra.mxu0 0
    %1544 = vmatprep.subr.bf16.mxu0 0
    %1545 = vmatpush1.bf16.msra.mxu0 0
    %1546 = vmatprep.subr.bf16.mxu0 0
    %1547 = vmatpush1.bf16.msra.mxu0 0
    %1548 = vmatprep.subr.bf16.mxu0 0
    %1549 = vmatpush1.bf16.msra.mxu0 0
    %1550 = vmatprep.subr.bf16.mxu0 0
    %1551 = vmatpush1.bf16.msra.mxu0 0
    %1552 = vmatprep.subr.bf16.mxu0 0
    %1553 = vmatpush1.bf16.msra.mxu0 0
    %1554 = vmatprep.subr.bf16.mxu0 0
    %1555 = vmatpush1.bf16.msra.mxu0 0
    %1556 = vmatprep.subr.bf16.mxu0 0
    %1557 = vmatpush1.bf16.msra.mxu0 0
    %1558 = vmatprep.subr.bf16.mxu0 0
    %1559 = vmatpush1.bf16.msra.mxu0 0
    %1560 = vmatprep.subr.bf16.mxu0 0
    %1561 = vmatpush1.bf16.msra.mxu0 0
    %1562 = vmatprep.subr.bf16.mxu0 0
    %1563 = vmatpush1.bf16.msra.mxu0 0
    %1564 = vmatprep.subr.bf16.mxu0 0
    %1565 = vmatpush1.bf16.msra.mxu0 0
    %1566 = vmatprep.mubr.bf16.mxu0 0
    %1567 = vmatmul.mubr.bf16.gmra.mrb[0].mxu0 %v1529
    %v1568 = vpop.f32.mrb[0].mxu0
    %v1569 = vadd.f32 %v1501, %v1568
    %v1570 = vpop.f32.mrb[0].mxu0
    %v1571 = vadd.f32 %v1501, %v1570
    %v1572 = vpop.f32.mrb[0].mxu0
    %v1573 = vadd.f32 %v1506, %v1572
    %v1574 = vpop.f32.mrb[0].mxu0
    %v1575 = vadd.f32 %v1506, %v1574
    %1576 = vmatprep.mubr.bf16.mxu0 0
    %1577 = vmatmul.mubr.bf16.gmra.mrb[0].mxu0 %v1532
    %v1578 = vpop.f32.mrb[0].mxu0
    %v1579 = vadd.f32 %v1511, %v1578
    %v1580 = vpop.f32.mrb[0].mxu0
    %v1581 = vadd.f32 %v1511, %v1580
    %v1582 = vpop.f32.mrb[0].mxu0
    %v1583 = vadd.f32 %v1516, %v1582
    %v1584 = vpop.f32.mrb[0].mxu0
    %v1585 = vadd.f32 %v1516, %v1584
    %1586 = vdwg.mxu0
    %vm1587 = vcmp.ge.s32.totalorder %v42, 32
    %v1588 = vsel %vm1587, 1.0, 0.0
    %vm1589 = vcmp.lt.s32.totalorder %v42, 96
    %v1590 = vsel %vm1589, 1.0, 0.0
    %1591 = vrot.lane.b32.xlu0 %v1569, 32
    %v1592 = vpop.permute.xlu0 %1591
    %1593 = vrot.lane.b32.xlu0 %v1573, 32
    %v1594 = vpop.permute.xlu0 %1593
    %1595 = vrot.lane.b32.xlu0 %v1579, 32
    %v1596 = vpop.permute.xlu0 %1595
    %1597 = vrot.lane.b32.xlu0 %v1583, 32
    %v1598 = vpop.permute.xlu0 %1597
    %1599 = vrot.lane.b32.xlu0 %v1571, 32
    %v1600 = vpop.permute.xlu0 %1599
    %1601 = vrot.lane.b32.xlu0 %v1575, 32
    %v1602 = vpop.permute.xlu0 %1601
    %1603 = vrot.lane.b32.xlu0 %v1581, 32
    %v1604 = vpop.permute.xlu0 %1603
    %1605 = vrot.lane.b32.xlu0 %v1585, 32
    %v1606 = vpop.permute.xlu0 %1605
    %vm1607 = vcmp.lt.s32.totalorder %v42, 32
    %v1608 = vsel %vm1607, %v1592, %v1600
    %v1609 = vsel %vm1607, %v1594, %v1602
    %v1610 = vsel %vm1607, %v1596, %v1604
    %v1611 = vsel %vm1607, %v1598, %v1606
    %v1612 = vsel %vm1607, %v1600, %v1592
    %v1613 = vsel %vm1607, %v1602, %v1594
    %v1614 = vsel %vm1607, %v1604, %v1596
    %v1615 = vsel %vm1607, %v1606, %v1598
    %v1616 = vlaneseq
    %v1617 = vshrl.u32 %v1616, 7
    %v1618 = vsub.s32 0, %v1617
    %v1619 = vrot.slane %v1588, %v1618
    %v1620 = vmul.f32 %v1612, %v1619
    %v1621 = vmul.f32 %v1608, %v1619
    %v1622 = vmul.f32 %v1613, %v1619
    %v1623 = vmul.f32 %v1609, %v1619
    %v1624 = vmul.f32 %v1614, %v1619
    %v1625 = vmul.f32 %v1610, %v1619
    %v1626 = vmul.f32 %v1615, %v1619
    %v1627 = vmul.f32 %v1611, %v1619
    %1628 = vrot.lane.b32.xlu0 %v1569, 96
    %v1629 = vpop.permute.xlu0 %1628
    %1630 = vrot.lane.b32.xlu0 %v1573, 96
    %v1631 = vpop.permute.xlu0 %1630
    %1632 = vrot.lane.b32.xlu0 %v1579, 96
    %v1633 = vpop.permute.xlu0 %1632
    %1634 = vrot.lane.b32.xlu0 %v1583, 96
    %v1635 = vpop.permute.xlu0 %1634
    %1636 = vrot.lane.b32.xlu0 %v1571, 96
    %v1637 = vpop.permute.xlu0 %1636
    %1638 = vrot.lane.b32.xlu0 %v1575, 96
    %v1639 = vpop.permute.xlu0 %1638
    %1640 = vrot.lane.b32.xlu0 %v1581, 96
    %v1641 = vpop.permute.xlu0 %1640
    %1642 = vrot.lane.b32.xlu0 %v1585, 96
    %v1643 = vpop.permute.xlu0 %1642
    %v1644 = vsel %vm1589, %v1629, %v1637
    %v1645 = vsel %vm1589, %v1631, %v1639
    %v1646 = vsel %vm1589, %v1633, %v1641
    %v1647 = vsel %vm1589, %v1635, %v1643
    %v1648 = vsel %vm1589, %v1637, %v1629
    %v1649 = vsel %vm1589, %v1639, %v1631
    %v1650 = vsel %vm1589, %v1641, %v1633
    %v1651 = vsel %vm1589, %v1643, %v1635
    %v1652 = vlaneseq
    %v1653 = vshrl.u32 %v1652, 7
    %v1654 = vsub.s32 0, %v1653
    %v1655 = vrot.slane %v1590, %v1654
    %v1656 = vmul.f32 %v1644, %v1655
    %v1657 = vmul.f32 %v1648, %v1655
    %v1658 = vmul.f32 %v1645, %v1655
    %v1659 = vmul.f32 %v1649, %v1655
    %v1660 = vmul.f32 %v1646, %v1655
    %v1661 = vmul.f32 %v1650, %v1655
    %v1662 = vmul.f32 %v1647, %v1655
    %v1663 = vmul.f32 %v1651, %v1655
    %v1664 = vpack.c.bf16 %v1622, %v1620
    %v1665 = vpack.c.bf16 %v1623, %v1621
    %v1666 = vpack.c.bf16 %v1626, %v1624
    %v1667 = vpack.c.bf16 %v1627, %v1625
    %1668 = vst [vmem:[#allocation2] sm:$0xff] %v1664
    %1669 = vst [vmem:[#allocation2 + $0x8] sm:$0xff] %v1665
    %1670 = vst [vmem:[#allocation2 + $0x10] sm:$0xff] %v1666
    %1671 = vst [vmem:[#allocation2 + $0x18] sm:$0xff] %v1667
    %v1672 = vpack.c.bf16 %v1573, %v1569
    %v1673 = vpack.c.bf16 %v1575, %v1571
    %v1674 = vpack.c.bf16 %v1583, %v1579
    %v1675 = vpack.c.bf16 %v1585, %v1581
    %1676 = vst [vmem:[#allocation2 + $0x20] sm:$0xff] %v1672
    %1677 = vst [vmem:[#allocation2 + $0x28] sm:$0xff] %v1673
    %1678 = vst [vmem:[#allocation2 + $0x30] sm:$0xff] %v1674
    %1679 = vst [vmem:[#allocation2 + $0x38] sm:$0xff] %v1675
    %v1680 = vpack.c.bf16 %v1658, %v1656
    %v1681 = vpack.c.bf16 %v1659, %v1657
    %v1682 = vpack.c.bf16 %v1662, %v1660
    %v1683 = vpack.c.bf16 %v1663, %v1661
    %1684 = vst [vmem:[#allocation2 + $0x40] sm:$0xff] %v1680
    %1685 = vst [vmem:[#allocation2 + $0x48] sm:$0xff] %v1681
    %1686 = vst [vmem:[#allocation2 + $0x50] sm:$0xff] %v1682
    %1687 = vst [vmem:[#allocation2 + $0x58] sm:$0xff] %v1683
    %s1688 = scalar_lea.vmem %s3, 40
    %v1689 = vld [vmem:[%s1688] sm:$0xf]
    %v1690 = vld [vmem:[%s1688 + $0x4] sm:$0xf]
    %v1691 = vld [vmem:[#allocation2] sm:$0xff]
    %v1692 = vld [vmem:[#allocation2 + $0x8] sm:$0xff]
    %v1693 = vld [vmem:[#allocation2 + $0x10] sm:$0xff]
    %v1694 = vld [vmem:[#allocation2 + $0x18] sm:$0xff]
    %v1695 = vld [vmem:[#allocation2 + $0x20] sm:$0xff]
    %v1696 = vld [vmem:[#allocation2 + $0x28] sm:$0xff]
    %v1697 = vld [vmem:[#allocation2 + $0x30] sm:$0xff]
    %v1698 = vld [vmem:[#allocation2 + $0x38] sm:$0xff]
    %v1699 = vld [vmem:[#allocation2 + $0x40] sm:$0xff]
    %v1700 = vld [vmem:[#allocation2 + $0x48] sm:$0xff]
    %v1701 = vld [vmem:[#allocation2 + $0x50] sm:$0xff]
    %v1702 = vld [vmem:[#allocation2 + $0x58] sm:$0xff]
    %v1705 = vunpack.c.l.b16 %v1689
    %v1706 = vunpack.c.l.b16 %v1690
    %v1707 = vpack.c.b16 %v1706, %v1705
    %v1709 = vsel %vm263, %v1707, 0
    %1711 = vmatprep.subr.bf16.mxu0 %v1692
    %1712 = vmatpush1.bf16.msra.mxu0 %v1691
    %1713 = vmatprep.subr.bf16.mxu0 %v1694
    %1714 = vmatpush1.bf16.msra.mxu0 %v1693
    %1715 = vmatprep.subr.bf16.mxu0 %v1696
    %1716 = vmatpush1.bf16.msra.mxu0 %v1695
    %1717 = vmatprep.subr.bf16.mxu0 %v1698
    %1718 = vmatpush1.bf16.msra.mxu0 %v1697
    %1719 = vmatprep.subr.bf16.mxu0 %v1700
    %1720 = vmatpush1.bf16.msra.mxu0 %v1699
    %1721 = vmatprep.subr.bf16.mxu0 %v1702
    %1722 = vmatpush1.bf16.msra.mxu0 %v1701
    %1723 = vmatprep.subr.bf16.mxu0 0
    %1724 = vmatpush1.bf16.msra.mxu0 0
    %1725 = vmatprep.subr.bf16.mxu0 0
    %1726 = vmatpush1.bf16.msra.mxu0 0
    %1727 = vmatprep.subr.bf16.mxu0 0
    %1728 = vmatpush1.bf16.msra.mxu0 0
    %1729 = vmatprep.subr.bf16.mxu0 0
    %1730 = vmatpush1.bf16.msra.mxu0 0
    %1731 = vmatprep.subr.bf16.mxu0 0
    %1732 = vmatpush1.bf16.msra.mxu0 0
    %1733 = vmatprep.subr.bf16.mxu0 0
    %1734 = vmatpush1.bf16.msra.mxu0 0
    %1735 = vmatprep.subr.bf16.mxu0 0
    %1736 = vmatpush1.bf16.msra.mxu0 0
    %1737 = vmatprep.subr.bf16.mxu0 0
    %1738 = vmatpush1.bf16.msra.mxu0 0
    %1739 = vmatprep.subr.bf16.mxu0 0
    %1740 = vmatpush1.bf16.msra.mxu0 0
    %1741 = vmatprep.subr.bf16.mxu0 0
    %1742 = vmatpush1.bf16.msra.mxu0 0
    %1743 = vmatprep.mubr.bf16.mxu0 0
    %1744 = vmatmul.mubr.bf16.gmra.mrb[0].mxu0 %v1709
    %v1745 = vpop.f32.mrb[0].mxu0
    %v1746 = vadd.f32 0.0, %v1745
    %v1747 = vpop.f32.mrb[0].mxu0
    %v1748 = vadd.f32 0.0, %v1747
    %v1749 = vpop.f32.mrb[0].mxu0
    %v1750 = vadd.f32 0.0, %v1749
    %v1751 = vpop.f32.mrb[0].mxu0
    %v1752 = vadd.f32 0.0, %v1751
    %1753 = vdwg.mxu0
    %v1754 = vadd.f32 %v1482, %v1746
    %v1755 = vadd.f32 %v1483, %v1748
    %v1756 = vadd.f32 %v1484, %v1750
    %v1757 = vadd.f32 %v1485, %v1752
    %s1758 = scalar_lea.vmem %s4, 80
    %v1759 = vld [vmem:[%s1758] sm:$0xff]
    %v1760 = vld [vmem:[%s1758 + $0x8] sm:$0xff]
    %1762 = vset.pattern.permute.xlu0 0
    %1763 = vperm.xlu0 %1762, %v1759
    %v1764 = vpop.permute.xlu0 %1763
    %1767 = vset.pattern.permute.xlu0 0
    %1768 = vperm.xlu0 %1767, %v1760
    %v1769 = vpop.permute.xlu0 %1768
    %v1771 = vadd.f32 %v1754, %v1764
    %v1772 = vadd.f32 %v1755, %v1764
    %v1773 = vadd.f32 %v1756, %v1769
    %v1774 = vadd.f32 %v1757, %v1769
    %s1775 = scalar_lea.vmem %s1, 96
    %v1776 = vld [vmem:[%s1775] sm:$0xf]
    %v1777 = vld [vmem:[%s1775 + $0x4] sm:$0xf]
    %v1778 = vld [vmem:[%s1775 + $0x8] sm:$0xf]
    %v1779 = vld [vmem:[%s1775 + $0xc] sm:$0xf]
    %v1780 = vpack.c.bf16 %v1773, %v1771
    %v1781 = vpack.c.bf16 %v1774, %v1772
    %s1782 = scalar_lea.vmem %s2, 192
    %v1783 = vld [vmem:[%s1782] sm:$0xff]
    %v1784 = vld [vmem:[%s1782 + $0x8] sm:$0xff]
    %v1785 = vld [vmem:[%s1782 + $0x10] sm:$0xff]
    %v1786 = vld [vmem:[%s1782 + $0x18] sm:$0xff]
    %1788 = vset.pattern.permute.xlu0 0
    %1789 = vperm.xlu0 %1788, %v1783
    %v1790 = vpop.permute.xlu0 %1789
    %1793 = vset.pattern.permute.xlu0 0
    %1794 = vperm.xlu0 %1793, %v1784
    %v1795 = vpop.permute.xlu0 %1794
    %1798 = vset.pattern.permute.xlu0 0
    %1799 = vperm.xlu0 %1798, %v1785
    %v1800 = vpop.permute.xlu0 %1799
    %1803 = vset.pattern.permute.xlu0 0
    %1804 = vperm.xlu0 %1803, %v1786
    %v1805 = vpop.permute.xlu0 %1804
    %v1811 = vunpack.c.l.b16 %v1776
    %v1812 = vunpack.c.l.b16 %v1777
    %v1813 = vunpack.c.l.b16 %v1778
    %v1814 = vunpack.c.l.b16 %v1779
    %v1815 = vpack.c.b16 %v1812, %v1811
    %v1816 = vpack.c.b16 %v1814, %v1813
    %v1818 = vsel %vm83, %v1815, 0
    %v1821 = vsel %vm83, %v1816, 0
    %1823 = vmatprep.subr.bf16.mxu0 %v1781
    %1824 = vmatpush1.bf16.msra.mxu0 %v1780
    %1825 = vmatprep.subr.bf16.mxu0 0
    %1826 = vmatpush1.bf16.msra.mxu0 0
    %1827 = vmatprep.subr.bf16.mxu0 0
    %1828 = vmatpush1.bf16.msra.mxu0 0
    %1829 = vmatprep.subr.bf16.mxu0 0
    %1830 = vmatpush1.bf16.msra.mxu0 0
    %1831 = vmatprep.subr.bf16.mxu0 0
    %1832 = vmatpush1.bf16.msra.mxu0 0
    %1833 = vmatprep.subr.bf16.mxu0 0
    %1834 = vmatpush1.bf16.msra.mxu0 0
    %1835 = vmatprep.subr.bf16.mxu0 0
    %1836 = vmatpush1.bf16.msra.mxu0 0
    %1837 = vmatprep.subr.bf16.mxu0 0
    %1838 = vmatpush1.bf16.msra.mxu0 0
    %1839 = vmatprep.subr.bf16.mxu0 0
    %1840 = vmatpush1.bf16.msra.mxu0 0
    %1841 = vmatprep.subr.bf16.mxu0 0
    %1842 = vmatpush1.bf16.msra.mxu0 0
    %1843 = vmatprep.subr.bf16.mxu0 0
    %1844 = vmatpush1.bf16.msra.mxu0 0
    %1845 = vmatprep.subr.bf16.mxu0 0
    %1846 = vmatpush1.bf16.msra.mxu0 0
    %1847 = vmatprep.subr.bf16.mxu0 0
    %1848 = vmatpush1.bf16.msra.mxu0 0
    %1849 = vmatprep.subr.bf16.mxu0 0
    %1850 = vmatpush1.bf16.msra.mxu0 0
    %1851 = vmatprep.subr.bf16.mxu0 0
    %1852 = vmatpush1.bf16.msra.mxu0 0
    %1853 = vmatprep.subr.bf16.mxu0 0
    %1854 = vmatpush1.bf16.msra.mxu0 0
    %1855 = vmatprep.mubr.bf16.mxu0 0
    %1856 = vmatmul.mubr.bf16.gmra.mrb[0].mxu0 %v1818
    %v1857 = vpop.f32.mrb[0].mxu0
    %v1858 = vadd.f32 %v1790, %v1857
    %v1859 = vpop.f32.mrb[0].mxu0
    %v1860 = vadd.f32 %v1790, %v1859
    %v1861 = vpop.f32.mrb[0].mxu0
    %v1862 = vadd.f32 %v1795, %v1861
    %v1863 = vpop.f32.mrb[0].mxu0
    %v1864 = vadd.f32 %v1795, %v1863
    %1865 = vmatprep.mubr.bf16.mxu0 0
    %1866 = vmatmul.mubr.bf16.gmra.mrb[0].mxu0 %v1821
    %v1867 = vpop.f32.mrb[0].mxu0
    %v1868 = vadd.f32 %v1800, %v1867
    %v1869 = vpop.f32.mrb[0].mxu0
    %v1870 = vadd.f32 %v1800, %v1869
    %v1871 = vpop.f32.mrb[0].mxu0
    %v1872 = vadd.f32 %v1805, %v1871
    %v1873 = vpop.f32.mrb[0].mxu0
    %v1874 = vadd.f32 %v1805, %v1873
    %1875 = vdwg.mxu0
    %vm1876 = vcmp.ge.s32.totalorder %v42, 64
    %v1877 = vsel %vm1876, 1.0, 0.0
    %vm1878 = vcmp.lt.s32.totalorder %v42, 64
    %v1879 = vsel %vm1878, 1.0, 0.0
    %1880 = vrot.lane.b32.xlu0 %v1858, 64
    %v1881 = vpop.permute.xlu0 %1880
    %1882 = vrot.lane.b32.xlu0 %v1862, 64
    %v1883 = vpop.permute.xlu0 %1882
    %1884 = vrot.lane.b32.xlu0 %v1868, 64
    %v1885 = vpop.permute.xlu0 %1884
    %1886 = vrot.lane.b32.xlu0 %v1872, 64
    %v1887 = vpop.permute.xlu0 %1886
    %1888 = vrot.lane.b32.xlu0 %v1860, 64
    %v1889 = vpop.permute.xlu0 %1888
    %1890 = vrot.lane.b32.xlu0 %v1864, 64
    %v1891 = vpop.permute.xlu0 %1890
    %1892 = vrot.lane.b32.xlu0 %v1870, 64
    %v1893 = vpop.permute.xlu0 %1892
    %1894 = vrot.lane.b32.xlu0 %v1874, 64
    %v1895 = vpop.permute.xlu0 %1894
    %v1896 = vsel %vm1878, %v1881, %v1889
    %v1897 = vsel %vm1878, %v1883, %v1891
    %v1898 = vsel %vm1878, %v1885, %v1893
    %v1899 = vsel %vm1878, %v1887, %v1895
    %v1900 = vsel %vm1878, %v1889, %v1881
    %v1901 = vsel %vm1878, %v1891, %v1883
    %v1902 = vsel %vm1878, %v1893, %v1885
    %v1903 = vsel %vm1878, %v1895, %v1887
    %v1904 = vlaneseq
    %v1905 = vshrl.u32 %v1904, 7
    %v1906 = vsub.s32 0, %v1905
    %v1907 = vrot.slane %v1877, %v1906
    %v1908 = vmul.f32 %v1900, %v1907
    %v1909 = vmul.f32 %v1896, %v1907
    %v1910 = vmul.f32 %v1901, %v1907
    %v1911 = vmul.f32 %v1897, %v1907
    %v1912 = vmul.f32 %v1902, %v1907
    %v1913 = vmul.f32 %v1898, %v1907
    %v1914 = vmul.f32 %v1903, %v1907
    %v1915 = vmul.f32 %v1899, %v1907
    %v1916 = vlaneseq
    %v1917 = vshrl.u32 %v1916, 7
    %v1918 = vsub.s32 0, %v1917
    %v1919 = vrot.slane %v1879, %v1918
    %v1920 = vmul.f32 %v1896, %v1919
    %v1921 = vmul.f32 %v1900, %v1919
    %v1922 = vmul.f32 %v1897, %v1919
    %v1923 = vmul.f32 %v1901, %v1919
    %v1924 = vmul.f32 %v1898, %v1919
    %v1925 = vmul.f32 %v1902, %v1919
    %v1926 = vmul.f32 %v1899, %v1919
    %v1927 = vmul.f32 %v1903, %v1919
    %v1928 = vpack.c.bf16 %v1910, %v1908
    %v1929 = vpack.c.bf16 %v1911, %v1909
    %v1930 = vpack.c.bf16 %v1914, %v1912
    %v1931 = vpack.c.bf16 %v1915, %v1913
    %1932 = vst [vmem:[#allocation2] sm:$0xff] %v1928
    %1933 = vst [vmem:[#allocation2 + $0x8] sm:$0xff] %v1929
    %1934 = vst [vmem:[#allocation2 + $0x10] sm:$0xff] %v1930
    %1935 = vst [vmem:[#allocation2 + $0x18] sm:$0xff] %v1931
    %v1936 = vpack.c.bf16 %v1862, %v1858
    %v1937 = vpack.c.bf16 %v1864, %v1860
    %v1938 = vpack.c.bf16 %v1872, %v1868
    %v1939 = vpack.c.bf16 %v1874, %v1870
    %1940 = vst [vmem:[#allocation2 + $0x20] sm:$0xff] %v1936
    %1941 = vst [vmem:[#allocation2 + $0x28] sm:$0xff] %v1937
    %1942 = vst [vmem:[#allocation2 + $0x30] sm:$0xff] %v1938
    %1943 = vst [vmem:[#allocation2 + $0x38] sm:$0xff] %v1939
    %v1944 = vpack.c.bf16 %v1922, %v1920
    %v1945 = vpack.c.bf16 %v1923, %v1921
    %v1946 = vpack.c.bf16 %v1926, %v1924
    %v1947 = vpack.c.bf16 %v1927, %v1925
    %1948 = vst [vmem:[#allocation2 + $0x40] sm:$0xff] %v1944
    %1949 = vst [vmem:[#allocation2 + $0x48] sm:$0xff] %v1945
    %1950 = vst [vmem:[#allocation2 + $0x50] sm:$0xff] %v1946
    %1951 = vst [vmem:[#allocation2 + $0x58] sm:$0xff] %v1947
    %s1952 = scalar_lea.vmem %s3, 48
    %v1953 = vld [vmem:[%s1952] sm:$0xf]
    %v1954 = vld [vmem:[%s1952 + $0x4] sm:$0xf]
    %v1955 = vld [vmem:[#allocation2] sm:$0xff]
    %v1956 = vld [vmem:[#allocation2 + $0x8] sm:$0xff]
    %v1957 = vld [vmem:[#allocation2 + $0x10] sm:$0xff]
    %v1958 = vld [vmem:[#allocation2 + $0x18] sm:$0xff]
    %v1959 = vld [vmem:[#allocation2 + $0x20] sm:$0xff]
    %v1960 = vld [vmem:[#allocation2 + $0x28] sm:$0xff]
    %v1961 = vld [vmem:[#allocation2 + $0x30] sm:$0xff]
    %v1962 = vld [vmem:[#allocation2 + $0x38] sm:$0xff]
    %v1963 = vld [vmem:[#allocation2 + $0x40] sm:$0xff]
    %v1964 = vld [vmem:[#allocation2 + $0x48] sm:$0xff]
    %v1965 = vld [vmem:[#allocation2 + $0x50] sm:$0xff]
    %v1966 = vld [vmem:[#allocation2 + $0x58] sm:$0xff]
    %v1969 = vunpack.c.l.b16 %v1953
    %v1970 = vunpack.c.l.b16 %v1954
    %v1971 = vpack.c.b16 %v1970, %v1969
    %v1973 = vsel %vm263, %v1971, 0
    %1975 = vmatprep.subr.bf16.mxu0 %v1956
    %1976 = vmatpush1.bf16.msra.mxu0 %v1955
    %1977 = vmatprep.subr.bf16.mxu0 %v1958
    %1978 = vmatpush1.bf16.msra.mxu0 %v1957
    %1979 = vmatprep.subr.bf16.mxu0 %v1960
    %1980 = vmatpush1.bf16.msra.mxu0 %v1959
    %1981 = vmatprep.subr.bf16.mxu0 %v1962
    %1982 = vmatpush1.bf16.msra.mxu0 %v1961
    %1983 = vmatprep.subr.bf16.mxu0 %v1964
    %1984 = vmatpush1.bf16.msra.mxu0 %v1963
    %1985 = vmatprep.subr.bf16.mxu0 %v1966
    %1986 = vmatpush1.bf16.msra.mxu0 %v1965
    %1987 = vmatprep.subr.bf16.mxu0 0
    %1988 = vmatpush1.bf16.msra.mxu0 0
    %1989 = vmatprep.subr.bf16.mxu0 0
    %1990 = vmatpush1.bf16.msra.mxu0 0
    %1991 = vmatprep.subr.bf16.mxu0 0
    %1992 = vmatpush1.bf16.msra.mxu0 0
    %1993 = vmatprep.subr.bf16.mxu0 0
    %1994 = vmatpush1.bf16.msra.mxu0 0
    %1995 = vmatprep.subr.bf16.mxu0 0
    %1996 = vmatpush1.bf16.msra.mxu0 0
    %1997 = vmatprep.subr.bf16.mxu0 0
    %1998 = vmatpush1.bf16.msra.mxu0 0
    %1999 = vmatprep.subr.bf16.mxu0 0
    %2000 = vmatpush1.bf16.msra.mxu0 0
    %2001 = vmatprep.subr.bf16.mxu0 0
    %2002 = vmatpush1.bf16.msra.mxu0 0
    %2003 = vmatprep.subr.bf16.mxu0 0
    %2004 = vmatpush1.bf16.msra.mxu0 0
    %2005 = vmatprep.subr.bf16.mxu0 0
    %2006 = vmatpush1.bf16.msra.mxu0 0
    %2007 = vmatprep.mubr.bf16.mxu0 0
    %2008 = vmatmul.mubr.bf16.gmra.mrb[0].mxu0 %v1973
    %v2009 = vpop.f32.mrb[0].mxu0
    %v2010 = vadd.f32 0.0, %v2009
    %v2011 = vpop.f32.mrb[0].mxu0
    %v2012 = vadd.f32 0.0, %v2011
    %v2013 = vpop.f32.mrb[0].mxu0
    %v2014 = vadd.f32 0.0, %v2013
    %v2015 = vpop.f32.mrb[0].mxu0
    %v2016 = vadd.f32 0.0, %v2015
    %2017 = vdwg.mxu0
    %v2018 = vadd.f32 %v1771, %v2010
    %v2019 = vadd.f32 %v1772, %v2012
    %v2020 = vadd.f32 %v1773, %v2014
    %v2021 = vadd.f32 %v1774, %v2016
    %s2022 = scalar_lea.vmem %s4, 96
    %v2023 = vld [vmem:[%s2022] sm:$0xff]
    %v2024 = vld [vmem:[%s2022 + $0x8] sm:$0xff]
    %2026 = vset.pattern.permute.xlu0 0
    %2027 = vperm.xlu0 %2026, %v2023
    %v2028 = vpop.permute.xlu0 %2027
    %2031 = vset.pattern.permute.xlu0 0
    %2032 = vperm.xlu0 %2031, %v2024
    %v2033 = vpop.permute.xlu0 %2032
    %v2035 = vadd.f32 %v2018, %v2028
    %v2036 = vadd.f32 %v2019, %v2028
    %v2037 = vadd.f32 %v2020, %v2033
    %v2038 = vadd.f32 %v2021, %v2033
    %s2039 = scalar_lea.vmem %s1, 112
    %v2040 = vld [vmem:[%s2039] sm:$0xf]
    %v2041 = vld [vmem:[%s2039 + $0x4] sm:$0xf]
    %v2042 = vld [vmem:[%s2039 + $0x8] sm:$0xf]
    %v2043 = vld [vmem:[%s2039 + $0xc] sm:$0xf]
    %v2044 = vpack.c.bf16 %v2037, %v2035
    %v2045 = vpack.c.bf16 %v2038, %v2036
    %s2046 = scalar_lea.vmem %s2, 224
    %v2047 = vld [vmem:[%s2046] sm:$0xff]
    %v2048 = vld [vmem:[%s2046 + $0x8] sm:$0xff]
    %v2049 = vld [vmem:[%s2046 + $0x10] sm:$0xff]
    %v2050 = vld [vmem:[%s2046 + $0x18] sm:$0xff]
    %2052 = vset.pattern.permute.xlu0 0
    %2053 = vperm.xlu0 %2052, %v2047
    %v2054 = vpop.permute.xlu0 %2053
    %2057 = vset.pattern.permute.xlu0 0
    %2058 = vperm.xlu0 %2057, %v2048
    %v2059 = vpop.permute.xlu0 %2058
    %2062 = vset.pattern.permute.xlu0 0
    %2063 = vperm.xlu0 %2062, %v2049
    %v2064 = vpop.permute.xlu0 %2063
    %2067 = vset.pattern.permute.xlu0 0
    %2068 = vperm.xlu0 %2067, %v2050
    %v2069 = vpop.permute.xlu0 %2068
    %v2075 = vunpack.c.l.b16 %v2040
    %v2076 = vunpack.c.l.b16 %v2041
    %v2077 = vunpack.c.l.b16 %v2042
    %v2078 = vunpack.c.l.b16 %v2043
    %v2079 = vpack.c.b16 %v2076, %v2075
    %v2080 = vpack.c.b16 %v2078, %v2077
    %v2082 = vsel %vm83, %v2079, 0
    %v2085 = vsel %vm83, %v2080, 0
    %2087 = vmatprep.subr.bf16.mxu0 %v2045
    %2088 = vmatpush1.bf16.msra.mxu0 %v2044
    %2089 = vmatprep.subr.bf16.mxu0 0
    %2090 = vmatpush1.bf16.msra.mxu0 0
    %2091 = vmatprep.subr.bf16.mxu0 0
    %2092 = vmatpush1.bf16.msra.mxu0 0
    %2093 = vmatprep.subr.bf16.mxu0 0
    %2094 = vmatpush1.bf16.msra.mxu0 0
    %2095 = vmatprep.subr.bf16.mxu0 0
    %2096 = vmatpush1.bf16.msra.mxu0 0
    %2097 = vmatprep.subr.bf16.mxu0 0
    %2098 = vmatpush1.bf16.msra.mxu0 0
    %2099 = vmatprep.subr.bf16.mxu0 0
    %2100 = vmatpush1.bf16.msra.mxu0 0
    %2101 = vmatprep.subr.bf16.mxu0 0
    %2102 = vmatpush1.bf16.msra.mxu0 0
    %2103 = vmatprep.subr.bf16.mxu0 0
    %2104 = vmatpush1.bf16.msra.mxu0 0
    %2105 = vmatprep.subr.bf16.mxu0 0
    %2106 = vmatpush1.bf16.msra.mxu0 0
    %2107 = vmatprep.subr.bf16.mxu0 0
    %2108 = vmatpush1.bf16.msra.mxu0 0
    %2109 = vmatprep.subr.bf16.mxu0 0
    %2110 = vmatpush1.bf16.msra.mxu0 0
    %2111 = vmatprep.subr.bf16.mxu0 0
    %2112 = vmatpush1.bf16.msra.mxu0 0
    %2113 = vmatprep.subr.bf16.mxu0 0
    %2114 = vmatpush1.bf16.msra.mxu0 0
    %2115 = vmatprep.subr.bf16.mxu0 0
    %2116 = vmatpush1.bf16.msra.mxu0 0
    %2117 = vmatprep.subr.bf16.mxu0 0
    %2118 = vmatpush1.bf16.msra.mxu0 0
    %2119 = vmatprep.mubr.bf16.mxu0 0
    %2120 = vmatmul.mubr.bf16.gmra.mrb[0].mxu0 %v2082
    %v2121 = vpop.f32.mrb[0].mxu0
    %v2122 = vadd.f32 %v2054, %v2121
    %v2123 = vpop.f32.mrb[0].mxu0
    %v2124 = vadd.f32 %v2054, %v2123
    %v2125 = vpop.f32.mrb[0].mxu0
    %v2126 = vadd.f32 %v2059, %v2125
    %v2127 = vpop.f32.mrb[0].mxu0
    %v2128 = vadd.f32 %v2059, %v2127
    %2129 = vmatprep.mubr.bf16.mxu0 0
    %2130 = vmatmul.mubr.bf16.gmra.mrb[0].mxu0 %v2085
    %v2131 = vpop.f32.mrb[0].mxu0
    %v2132 = vadd.f32 %v2064, %v2131
    %v2133 = vpop.f32.mrb[0].mxu0
    %v2134 = vadd.f32 %v2064, %v2133
    %v2135 = vpop.f32.mrb[0].mxu0
    %v2136 = vadd.f32 %v2069, %v2135
    %v2137 = vpop.f32.mrb[0].mxu0
    %v2138 = vadd.f32 %v2069, %v2137
    %2139 = vdwg.mxu0
    %s2140 = scalar_lea.vmem %s3, 56
    %v2141 = vld [vmem:[%s2140] sm:$0xf]
    %v2142 = vld [vmem:[%s2140 + $0x4] sm:$0xf]
    %v2143 = vpack.c.bf16 %v2126, %v2122
    %v2144 = vpack.c.bf16 %v2128, %v2124
    %v2145 = vpack.c.bf16 %v2136, %v2132
    %v2146 = vpack.c.bf16 %v2138, %v2134
    %v2149 = vunpack.c.l.b16 %v2141
    %v2150 = vunpack.c.l.b16 %v2142
    %v2151 = vpack.c.b16 %v2150, %v2149
    %2152 = vrot.lane.b32.xlu0 %v2151, 96
    %v2153 = vpop.permute.xlu0 %2152
    %vm2154 = vcmask 261120
    %v2156 = vsel %vm2154, %v2153, 0
    %2158 = vmatprep.subr.bf16.mxu0 %v2144
    %2159 = vmatpush1.bf16.msra.mxu0 %v2143
    %2160 = vmatprep.subr.bf16.mxu0 %v2146
    %2161 = vmatpush1.bf16.msra.mxu0 %v2145
    %2162 = vmatprep.subr.bf16.mxu0 0
    %2163 = vmatpush1.bf16.msra.mxu0 0
    %2164 = vmatprep.subr.bf16.mxu0 0
    %2165 = vmatpush1.bf16.msra.mxu0 0
    %2166 = vmatprep.subr.bf16.mxu0 0
    %2167 = vmatpush1.bf16.msra.mxu0 0
    %2168 = vmatprep.subr.bf16.mxu0 0
    %2169 = vmatpush1.bf16.msra.mxu0 0
    %2170 = vmatprep.subr.bf16.mxu0 0
    %2171 = vmatpush1.bf16.msra.mxu0 0
    %2172 = vmatprep.subr.bf16.mxu0 0
    %2173 = vmatpush1.bf16.msra.mxu0 0
    %2174 = vmatprep.subr.bf16.mxu0 0
    %2175 = vmatpush1.bf16.msra.mxu0 0
    %2176 = vmatprep.subr.bf16.mxu0 0
    %2177 = vmatpush1.bf16.msra.mxu0 0
    %2178 = vmatprep.subr.bf16.mxu0 0
    %2179 = vmatpush1.bf16.msra.mxu0 0
    %2180 = vmatprep.subr.bf16.mxu0 0
    %2181 = vmatpush1.bf16.msra.mxu0 0
    %2182 = vmatprep.subr.bf16.mxu0 0
    %2183 = vmatpush1.bf16.msra.mxu0 0
    %2184 = vmatprep.subr.bf16.mxu0 0
    %2185 = vmatpush1.bf16.msra.mxu0 0
    %2186 = vmatprep.subr.bf16.mxu0 0
    %2187 = vmatpush1.bf16.msra.mxu0 0
    %2188 = vmatprep.subr.bf16.mxu0 0
    %2189 = vmatpush1.bf16.msra.mxu0 0
    %2190 = vmatprep.mubr.bf16.mxu0 0
    %2191 = vmatmul.mubr.bf16.gmra.mrb[0].mxu0 %v2156
    %v2192 = vpop.f32.mrb[0].mxu0
    %v2193 = vadd.f32 0.0, %v2192
    %v2194 = vpop.f32.mrb[0].mxu0
    %v2195 = vadd.f32 0.0, %v2194
    %v2196 = vpop.f32.mrb[0].mxu0
    %v2197 = vadd.f32 0.0, %v2196
    %v2198 = vpop.f32.mrb[0].mxu0
    %v2199 = vadd.f32 0.0, %v2198
    %2200 = vdwg.mxu0
    %v2201 = vadd.f32 %v2035, %v2193
    %v2202 = vadd.f32 %v2036, %v2195
    %v2203 = vadd.f32 %v2037, %v2197
    %v2204 = vadd.f32 %v2038, %v2199
    %s2205 = scalar_lea.vmem %s4, 112
    %v2206 = vld [vmem:[%s2205] sm:$0xff]
    %v2207 = vld [vmem:[%s2205 + $0x8] sm:$0xff]
    %2209 = vset.pattern.permute.xlu0 0
    %2210 = vperm.xlu0 %2209, %v2206
    %v2211 = vpop.permute.xlu0 %2210
    %2214 = vset.pattern.permute.xlu0 0
    %2215 = vperm.xlu0 %2214, %v2207
    %v2216 = vpop.permute.xlu0 %2215
    %v2218 = vadd.f32 %v2201, %v2211
    %v2219 = vadd.f32 %v2202, %v2211
    %v2220 = vadd.f32 %v2203, %v2216
    %v2221 = vadd.f32 %v2204, %v2216
    %2222 = vst [vmem:[#allocation6] sm:$0xff] %v2218
    %2223 = vst [vmem:[#allocation6 + $0x8] sm:$0xff] %v2220
    %s2224 = scalar_lea.vmem [#allocation6], 16
    %2225 = vst [vmem:[%s2224] sm:$0xff] %v2219
    %2226 = vst [vmem:[%s2224 + $0x8] sm:$0xff] %v2221
    // Predicated region
    $region26: #{fwd.1} parent=1 // pred_check
      _
    $region27: #{fwd.1} parent=1 // pred_check_branch
      %2228 = sbr.rel (0) target = $region29
    $region28: #{fwd.1} parent=1 // pred_region
      %s2230 = ssub.s32 512, 512
      %2231 = vsyncadd [#allocation5], %s2230
      %s2232 = sshll.u32 [#allocation6], 4
      %s2233 = int_to_ptr.vmem [resolvable:$true] %s2232
      %2238 = dma.vmem_to_hbm [thread:$0]  %s2233, 512, %s5, [#allocation5], 128, 128, 8
    $region29: #{fwd.1} parent=1 // pred_fallthru
      _
    // Predicated region
    $region30: #{fwd.1} parent=1 // pred_check
      _
    $region31: #{fwd.1} parent=1 // pred_check_branch
      %2240 = sbr.rel (0) target = $region33
    $region32: #{fwd.1} parent=1 // pred_region
      %2241 = dma.done [#allocation5], 512
    $region33: #{fwd.1} parent=1 // pred_fallthru
      _
    %2242 = vsyncpa [#allocation4], 1
    %2243 = vsyncpa [#allocation5], 1

</llo_original>
